<compile_context>
chip_gen: v6e
topology: v6e:2x2x1
jax: 0.10.0
libtpu: 0.0.40
codegen_flags: <defaults>
</compile_context>

<pallas_src>
import math
import functools

import jax
import jax.numpy as jnp
import numpy as np
from jax.experimental import pallas as pl
from jax.experimental.pallas import tpu as pltpu


# ----------------------------- helpers (glue) -------------------------------

def _gelu_exact(x):
    # PyTorch nn.GELU() default = exact (erf) variant.
    return 0.5 * x * (1.0 + jax.lax.erf(x * (1.0 / math.sqrt(2.0))))


def _rope_tables_signed(seqlen, hidden_dim):
    """cos table + sign-folded, lane-interleaved sin tables for in-kernel RoPE.

    rope(x) = x * cos + roll_left(x * s1) + roll_right(x * s2)
      s1: odd lanes hold -sin (even lanes 0)  -> rolled left onto even lanes
      s2: even lanes hold +sin (odd lanes 0)  -> rolled right onto odd lanes
    """
    half = hidden_dim // 2
    freq_seq = jnp.arange(half, dtype=jnp.float32) / half
    inv_freq = 10000.0 ** (-freq_seq)
    pos = jnp.arange(seqlen, dtype=jnp.float32)
    angles = pos[:, None] * inv_freq[None, :]                 # (S, half)
    cos_full = jnp.repeat(jnp.cos(angles), 2, axis=-1)        # (S, H)
    sin_full = jnp.repeat(jnp.sin(angles), 2, axis=-1)        # (S, H)
    even = (jnp.arange(hidden_dim) % 2) == 0
    s1 = jnp.where(even, 0.0, -sin_full)
    s2 = jnp.where(even, sin_full, 0.0)
    return cos_full, s1, s2


def _apply_rope_jax(x):
    """Interleaved RoPE on (B, S, H) arrays -- wrapper-side (XLA) version."""
    B, S, Hd = x.shape
    half = Hd // 2
    freq_seq = jnp.arange(half, dtype=x.dtype) / half
    inv_freq = 10000.0 ** (-freq_seq)
    pos = jnp.arange(S, dtype=x.dtype)
    angles = pos[:, None] * inv_freq[None, :]
    sin_a, cos_a = jnp.sin(angles)[None], jnp.cos(angles)[None]
    xr = x.reshape(B, S, half, 2)
    x1, x2 = xr[..., 0], xr[..., 1]
    y1 = x1 * cos_a - x2 * sin_a
    y2 = x1 * sin_a + x2 * cos_a
    return jnp.stack([y1, y2], axis=-1).reshape(B, S, Hd)


def _time_sincos(t, hidden_dim):
    half = hidden_dim // 2
    scale = math.log(10000.0) / (half - 1)
    freqs = jnp.exp(jnp.arange(half, dtype=jnp.float32) * -scale)
    e = t.astype(jnp.float32)[:, None] * freqs[None, :]       # (B, half)
    return jnp.concatenate([jnp.sin(e), jnp.cos(e)], axis=1)  # (B, H)


# ------------------------------ kernel body ----------------------------------

def _layernorm(x, gamma, beta, eps=1e-5):
    mu = jnp.mean(x, axis=-1, keepdims=True)
    var = jnp.mean((x - mu) ** 2, axis=-1, keepdims=True)
    return (x - mu) * jax.lax.rsqrt(var + eps) * gamma + beta


def _transformer_kernel(num_heads, cdt,
                        xt_ref, xc_ref, temb_ref, cos_ref, s1_ref, s2_ref,
                        w_in_ref, wqkv_ref, bqkv_ref, wkv_ref, bkv_ref,
                        wo_ref, wf1_ref, bf1_ref, wf2_ref,
                        w_out_ref, b_out_ref, hv_ref,
                        out_ref):
    f32 = jnp.float32
    TB, S1, Din = xt_ref.shape
    _, S2, H = xc_ref.shape
    M1 = TB * S1
    M2 = TB * S2

    # packed per-H vectors: [b_in, bo, bf2, g1, be1, g2, be2, pad]
    b_in = hv_ref[0:1, :]
    bo   = hv_ref[1:2, :]
    bf2  = hv_ref[2:3, :]
    g1   = hv_ref[3:4, :]
    be1  = hv_ref[4:5, :]
    g2   = hv_ref[5:6, :]
    be2  = hv_ref[6:7, :]

    # ---- input projection on the whole (TB*S1) row block (MXU, f32 acc) ----
    xt = jnp.dot(xt_ref[...].reshape(M1, Din), w_in_ref[...],
                 preferred_element_type=f32) + b_in                     # (M1, H) f32

    # ---- RoPE: sign-folded sin tables (single (S1,H) copy, broadcast) ----
    cosM = jnp.broadcast_to(cos_ref[...], (TB, S1, H)).reshape(M1, H)
    s1M  = jnp.broadcast_to(s1_ref[...],  (TB, S1, H)).reshape(M1, H)
    s2M  = jnp.broadcast_to(s2_ref[...],  (TB, S1, H)).reshape(M1, H)
    xt = (xt * cosM
          + pltpu.roll(xt * s1M, H - 1, axis=1)
          + pltpu.roll(xt * s2M, 1, axis=1))

    # ---- add time embedding, broadcast over the seq dim in-kernel ----
    xt = xt + jnp.broadcast_to(temb_ref[...], (TB, S1, H)).reshape(M1, H)

    # ---- fused QKV on x_t rows, fused KV on conditional rows (bf16 MXU) ----
    qkv = jnp.dot(xt.astype(cdt), wqkv_ref[...],
                  preferred_element_type=f32) + bqkv_ref[...]           # (M1, 3H)
    xc = xc_ref[...].reshape(M2, H)
    kv_c = jnp.dot(xc, wkv_ref[...],
                   preferred_element_type=f32) + bkv_ref[...]           # (M2, 2H)

    if num_heads == 1:
        q3  = qkv[:, :H].reshape(TB, S1, H)            # pre-scaled by 1/sqrt(hd)
        kt3 = qkv[:, H:2 * H].reshape(TB, S1, H)
        vt3 = qkv[:, 2 * H:].reshape(TB, S1, H)
        kc3 = kv_c[:, :H].reshape(TB, S2, H)
        vc3 = kv_c[:, H:].reshape(TB, S2, H)
        q_c = q3.astype(cdt)
        # scores vs conditional / x_t keys separately; concat only the tiny
        # (TB, S1, S2+S1) score block for the joint softmax.
        s = jnp.concatenate(
            [jnp.einsum('bqd,bkd->bqk', q_c, kc3.astype(cdt),
                        preferred_element_type=f32),
             jnp.einsum('bqd,bkd->bqk', q_c, kt3.astype(cdt),
                        preferred_element_type=f32)], axis=-1)
        s = s - jnp.max(s, axis=-1, keepdims=True)
        p = jnp.exp(s)
        p = p * pl.reciprocal(jnp.sum(p, axis=-1, keepdims=True), approx=True)
        p_c = p.astype(cdt)
        attn3 = (jnp.einsum('bqk,bkd->bqd', p_c[:, :, :S2], vc3.astype(cdt),
                            preferred_element_type=f32)
                 + jnp.einsum('bqk,bkd->bqd', p_c[:, :, S2:], vt3.astype(cdt),
                              preferred_element_type=f32))
    else:
        # head-batched attention (no per-head Python loop / lane concat)
        hd = H // num_heads
        q4  = qkv[:, :H].reshape(TB, S1, num_heads, hd)
        kt4 = qkv[:, H:2 * H].reshape(TB, S1, num_heads, hd)
        vt4 = qkv[:, 2 * H:].reshape(TB, S1, num_heads, hd)
        kc4 = kv_c[:, :H].reshape(TB, S2, num_heads, hd)
        vc4 = kv_c[:, H:].reshape(TB, S2, num_heads, hd)
        q_c = q4.astype(cdt)
        s = jnp.concatenate(
            [jnp.einsum('bqnd,bknd->bnqk', q_c, kc4.astype(cdt),
                        preferred_element_type=f32),
             jnp.einsum('bqnd,bknd->bnqk', q_c, kt4.astype(cdt),
                        preferred_element_type=f32)], axis=-1)
        s = s - jnp.max(s, axis=-1, keepdims=True)
        p = jnp.exp(s)
        p = p * pl.reciprocal(jnp.sum(p, axis=-1, keepdims=True), approx=True)
        p_c = p.astype(cdt)
        attn3 = (jnp.einsum('bnqk,bknd->bqnd', p_c[..., :S2], vc4.astype(cdt),
                            preferred_element_type=f32)
                 + jnp.einsum('bnqk,bknd->bqnd', p_c[..., S2:], vt4.astype(cdt),
                              preferred_element_type=f32)).reshape(TB, S1, H)

    attn = jnp.dot(attn3.reshape(M1, H).astype(cdt), wo_ref[...],
                   preferred_element_type=f32) + bo

    # ---- residual + LN + FFN + LN (f32) ----
    y = _layernorm(xt + attn, g1, be1)
    f = jnp.dot(y.astype(cdt), wf1_ref[...],
                preferred_element_type=f32) + bf1_ref[...]
    f = _gelu_exact(f)
    f = jnp.dot(f.astype(cdt), wf2_ref[...],
                preferred_element_type=f32) + bf2
    y = _layernorm(y + f, g2, be2)

    # ---- output projection back to input_dim ----
    out = jnp.dot(y.astype(cdt), w_out_ref[...],
                  preferred_element_type=f32) + b_out_ref[...]
    out_ref[...] = out.reshape(TB, S1, Din).astype(out_ref.dtype)


# ------------------------------ wrapper --------------------------------------

def custom_transformer_forward(params, x_t, t, x_cond, *, num_heads=1,
                               batch_block=None, m_target=256,
                               compute_dtype=jnp.bfloat16):
    """x_t: (B, S1, Din) f32; t: (B,) f32; x_cond: (B, S2) f32."""
    B, S1, Din = x_t.shape
    S2 = x_cond.shape[1]
    H = params['w_in'].shape[1]
    assert H % 2 == 0, "hidden_dim must be even (RoPE pairing)"
    assert H % num_heads == 0, "hidden_dim must be divisible by num_heads"
    f32 = jnp.float32
    cdt = compute_dtype

    # ---- batch tile: fill MXU rows but keep grid length >= 2 (pipelining +
    #      v7x second TensorCore); pad B up to a multiple of TB. ----
    if batch_block is None:
        tb_cap = max(1, m_target // max(S1, 1))
        batch_block = max(1, min(tb_cap, pl.cdiv(B, 2))) if B >= 2 else 1
    TB = batch_block
    grid_b = pl.cdiv(B, TB)
    B_pad = grid_b * TB
    if B_pad != B:
        pad = B_pad - B
        x_t = jnp.pad(x_t, ((0, pad), (0, 0), (0, 0)))
        x_cond = jnp.pad(x_cond, ((0, pad), (0, 0)))
        t = jnp.pad(t, ((0, pad),))

    hd = H // num_heads
    scale = 1.0 / math.sqrt(hd)

    # ---- glue computed once in XLA (batch-global / lane-sparse / M=1 work) ----
    cos_t, s1_t, s2_t = _rope_tables_signed(S1, H)             # (S1, H) f32, single copy

    # conditional projection (Linear(1,H) on scalars) + RoPE, done in wrapper
    xc = x_cond.astype(f32)[:, :, None] * params['w_cond'] + params['b_cond']
    xc = _apply_rope_jax(xc).astype(cdt)                       # (B_pad, S2, H)

    # time-embedding MLP, done in wrapper; broadcast over seq happens in-kernel
    tsc = _time_sincos(t, H)                                   # (B_pad, H)
    hmid = _gelu_exact(tsc @ params['w_t1'] + params['b_t1'])
    temb = (hmid @ params['w_t2'] + params['b_t2'])[:, None, :].astype(f32)  # (B_pad,1,H)

    # ---- fused / packed weights (matmul operands in compute dtype) ----
    wqkv = jnp.concatenate([params['wq'] * scale, params['wk'], params['wv']],
                           axis=1).astype(cdt)
    bqkv = jnp.concatenate([params['bq'] * scale, params['bk'], params['bv']], axis=1)
    wkv = jnp.concatenate([params['wk'], params['wv']], axis=1).astype(cdt)
    bkv = jnp.concatenate([params['bk'], params['bv']], axis=1)
    hvecs = jnp.concatenate([params['b_in'], params['bo'], params['bf2'],
                             params['g1'], params['be1'], params['g2'],
                             params['be2'], jnp.zeros((1, H), f32)], axis=0)  # (8,H)

    data = [x_t.astype(cdt), xc, temb]
    consts = [cos_t, s1_t, s2_t,
              params['w_in'].astype(cdt), wqkv, bqkv, wkv, bkv,
              params['wo'].astype(cdt),
              params['wf1'].astype(cdt), params['bf1'], params['wf2'].astype(cdt),
              params['w_out'].astype(cdt), params['b_out'], hvecs]

    def bspec(shape):
        nd = len(shape)
        return pl.BlockSpec((TB,) + tuple(shape[1:]),
                            lambda b, _nd=nd: (b,) + (0,) * (_nd - 1))

    def fspec(arr):
        nd = arr.ndim
        return pl.BlockSpec(tuple(arr.shape), lambda b, _nd=nd: (0,) * _nd)

    in_specs = ([bspec(x_t.shape), bspec(xc.shape), bspec(temb.shape)]
                + [fspec(a) for a in consts])

    kernel = functools.partial(_transformer_kernel, num_heads, cdt)

    out = pl.pallas_call(
        kernel,
        out_shape=jax.ShapeDtypeStruct((B_pad, S1, Din), f32),
        grid=(grid_b,),
        in_specs=in_specs,
        out_specs=bspec((B_pad, S1, Din)),
        compiler_params=pltpu.CompilerParams(
            dimension_semantics=("parallel",)),
    )(*data, *consts)
    return out[:B] if B_pad != B else out


# --------------------------- params + reference ------------------------------

PARAM_SHAPES = lambda input_dim, hidden_dim, ff: {
    'w_in': (input_dim, hidden_dim), 'b_in': (1, hidden_dim),
    'w_cond': (1, hidden_dim), 'b_cond': (1, hidden_dim),
    'w_t1': (hidden_dim, ff), 'b_t1': (1, ff),
    'w_t2': (ff, hidden_dim), 'b_t2': (1, hidden_dim),
    'wq': (hidden_dim, hidden_dim), 'bq': (1, hidden_dim),
    'wk': (hidden_dim, hidden_dim), 'bk': (1, hidden_dim),
    'wv': (hidden_dim, hidden_dim), 'bv': (1, hidden_dim),
    'wo': (hidden_dim, hidden_dim), 'bo': (1, hidden_dim),
    'g1': (1, hidden_dim), 'be1': (1, hidden_dim),
    'wf1': (hidden_dim, ff), 'bf1': (1, ff),
    'wf2': (ff, hidden_dim), 'bf2': (1, hidden_dim),
    'g2': (1, hidden_dim), 'be2': (1, hidden_dim),
    'w_out': (hidden_dim, input_dim), 'b_out': (1, input_dim),
}


def init_params(key, input_dim, hidden_dim):
    shapes = PARAM_SHAPES(input_dim, hidden_dim, 4 * hidden_dim)
    keys = jax.random.split(key, len(shapes))
    params = {}
    for (name, shp), k in zip(shapes.items(), keys):
        if name in ('g1', 'g2'):
            params[name] = jnp.ones(shp, jnp.float32) + 0.01 * jax.random.normal(k, shp, jnp.float32)
        elif name.startswith('b'):
            params[name] = 0.01 * jax.random.normal(k, shp, jnp.float32)
        else:
            params[name] = 0.02 * jax.random.normal(k, shp, jnp.float32)
    return params


def ref_forward(params, x_t, t, x_cond, *, num_heads=1):
    B, S1, _ = x_t.shape
    H = params['w_in'].shape[1]
    xt = x_t @ params['w_in'] + params['b_in']
    xc = x_cond[:, :, None] * params['w_cond'] + params['b_cond']
    xt = _apply_rope_jax(xt)
    xc = _apply_rope_jax(xc)
    tsc = _time_sincos(t, H)
    h = jax.nn.gelu(tsc @ params['w_t1'] + params['b_t1'], approximate=False)
    temb = h @ params['w_t2'] + params['b_t2']
    xt = xt + temb[:, None, :]

    combined = jnp.concatenate([xc, xt], axis=1)
    S = combined.shape[1]
    q = xt @ params['wq'] + params['bq']
    k = combined @ params['wk'] + params['bk']
    v = combined @ params['wv'] + params['bv']
    hd = H // num_heads
    qh = q.reshape(B, S1, num_heads, hd)
    kh = k.reshape(B, S, num_heads, hd)
    vh = v.reshape(B, S, num_heads, hd)
    sc = jnp.einsum('bqnd,bknd->bnqk', qh, kh) / math.sqrt(hd)
    p = jax.nn.softmax(sc, axis=-1)
    o = jnp.einsum('bnqk,bknd->bqnd', p, vh).reshape(B, S1, H)
    attn = o @ params['wo'] + params['bo']

    def ln(x, g, b):
        mu = jnp.mean(x, axis=-1, keepdims=True)
        var = jnp.mean((x - mu) ** 2, axis=-1, keepdims=True)
        return (x - mu) * jax.lax.rsqrt(var + 1e-5) * g + b

    y = ln(xt + attn, params['g1'], params['be1'])
    f = jax.nn.gelu(y @ params['wf1'] + params['bf1'], approximate=False)
    f = f @ params['wf2'] + params['bf2']
    y = ln(y + f, params['g2'], params['be2'])
    return y @ params['w_out'] + params['b_out']


# --------------------------------- main ---------------------------------------

if __name__ == "__main__":
    B, S1, S2, DIN, H, NH = 2, 8, 8, 256, 128, 1

    root = jax.random.PRNGKey(0)
    kp, kx, kc = jax.random.split(root, 3)
    params = init_params(kp, DIN, H)

    x_t = jax.random.normal(kx, (B, S1, DIN), jnp.float32)
    x_cond = jax.random.normal(kc, (B, S2), jnp.float32)
    t = jnp.array([3.0, 7.0], dtype=jnp.float32)

    out = custom_transformer_forward(params, x_t, t, x_cond, num_heads=NH)
    out = jax.block_until_ready(out)
    assert out.shape == (B, S1, DIN)

    ref = jax.block_until_ready(ref_forward(params, x_t, t, x_cond, num_heads=NH))
    # bf16 matmul path vs f32 reference: allow bf16-level tolerance.
    np.testing.assert_allclose(np.asarray(out), np.asarray(ref), rtol=5e-2, atol=5e-2)

    print("KERNEL_OK")
</pallas_src>

<mosaic_0001>
module attributes {stable_mosaic.version = 11 : i64} {
  func.func @_transformer_kernel(%arg0: i32, %arg1: memref<1x8x256xbf16, #tpu.memory_space<vmem>>, %arg2: memref<1x8x128xbf16, #tpu.memory_space<vmem>>, %arg3: memref<1x1x128xf32, #tpu.memory_space<vmem>>, %arg4: memref<8x128xf32, #tpu.memory_space<vmem>>, %arg5: memref<8x128xf32, #tpu.memory_space<vmem>>, %arg6: memref<8x128xf32, #tpu.memory_space<vmem>>, %arg7: memref<256x128xbf16, #tpu.memory_space<vmem>>, %arg8: memref<128x384xbf16, #tpu.memory_space<vmem>>, %arg9: memref<1x384xf32, #tpu.memory_space<vmem>>, %arg10: memref<128x256xbf16, #tpu.memory_space<vmem>>, %arg11: memref<1x256xf32, #tpu.memory_space<vmem>>, %arg12: memref<128x128xbf16, #tpu.memory_space<vmem>>, %arg13: memref<128x512xbf16, #tpu.memory_space<vmem>>, %arg14: memref<1x512xf32, #tpu.memory_space<vmem>>, %arg15: memref<512x128xbf16, #tpu.memory_space<vmem>>, %arg16: memref<128x256xbf16, #tpu.memory_space<vmem>>, %arg17: memref<1x256xf32, #tpu.memory_space<vmem>>, %arg18: memref<8x128xf32, #tpu.memory_space<vmem>>, %arg19: memref<1x8x256xf32, #tpu.memory_space<vmem>>) attributes {dimension_semantics = [#tpu.dimension_semantics<parallel>], iteration_bounds = array<i64: 2>, scalar_prefetch = 0 : i64, scratch_operands = 0 : i64, tpu.core_type = #tpu.core_type<tc>, window_params = [{transform_indices = @transform_0, window_bounds = array<i64: 1, 8, 256>}, {transform_indices = @transform_1, window_bounds = array<i64: 1, 8, 128>}, {transform_indices = @transform_2, window_bounds = array<i64: 1, 1, 128>}, {pipeline_mode = #tpu.pipeline_mode<synchronous>, transform_indices = @transform_3, window_bounds = array<i64: 8, 128>}, {pipeline_mode = #tpu.pipeline_mode<synchronous>, transform_indices = @transform_4, window_bounds = array<i64: 8, 128>}, {pipeline_mode = #tpu.pipeline_mode<synchronous>, transform_indices = @transform_5, window_bounds = array<i64: 8, 128>}, {pipeline_mode = #tpu.pipeline_mode<synchronous>, transform_indices = @transform_6, window_bounds = array<i64: 256, 128>}, {pipeline_mode = #tpu.pipeline_mode<synchronous>, transform_indices = @transform_7, window_bounds = array<i64: 128, 384>}, {pipeline_mode = #tpu.pipeline_mode<synchronous>, transform_indices = @transform_8, window_bounds = array<i64: 1, 384>}, {pipeline_mode = #tpu.pipeline_mode<synchronous>, transform_indices = @transform_9, window_bounds = array<i64: 128, 256>}, {pipeline_mode = #tpu.pipeline_mode<synchronous>, transform_indices = @transform_10, window_bounds = array<i64: 1, 256>}, {pipeline_mode = #tpu.pipeline_mode<synchronous>, transform_indices = @transform_11, window_bounds = array<i64: 128, 128>}, {pipeline_mode = #tpu.pipeline_mode<synchronous>, transform_indices = @transform_12, window_bounds = array<i64: 128, 512>}, {pipeline_mode = #tpu.pipeline_mode<synchronous>, transform_indices = @transform_13, window_bounds = array<i64: 1, 512>}, {pipeline_mode = #tpu.pipeline_mode<synchronous>, transform_indices = @transform_14, window_bounds = array<i64: 512, 128>}, {pipeline_mode = #tpu.pipeline_mode<synchronous>, transform_indices = @transform_15, window_bounds = array<i64: 128, 256>}, {pipeline_mode = #tpu.pipeline_mode<synchronous>, transform_indices = @transform_16, window_bounds = array<i64: 1, 256>}, {pipeline_mode = #tpu.pipeline_mode<synchronous>, transform_indices = @transform_17, window_bounds = array<i64: 8, 128>}, {transform_indices = @transform_18, window_bounds = array<i64: 1, 8, 256>}]} {
    %c0 = arith.constant 0 : index
    %c0_0 = arith.constant 0 : index
    %0 = vector.load %arg18[%c0, %c0_0] : memref<8x128xf32, #tpu.memory_space<vmem>>, vector<1x128xf32>
    %c1 = arith.constant 1 : index
    %c0_1 = arith.constant 0 : index
    %1 = vector.load %arg18[%c1, %c0_1] : memref<8x128xf32, #tpu.memory_space<vmem>>, vector<1x128xf32>
    %c2 = arith.constant 2 : index
    %c0_2 = arith.constant 0 : index
    %2 = vector.load %arg18[%c2, %c0_2] : memref<8x128xf32, #tpu.memory_space<vmem>>, vector<1x128xf32>
    %c3 = arith.constant 3 : index
    %c0_3 = arith.constant 0 : index
    %3 = vector.load %arg18[%c3, %c0_3] : memref<8x128xf32, #tpu.memory_space<vmem>>, vector<1x128xf32>
    %c4 = arith.constant 4 : index
    %c0_4 = arith.constant 0 : index
    %4 = vector.load %arg18[%c4, %c0_4] : memref<8x128xf32, #tpu.memory_space<vmem>>, vector<1x128xf32>
    %c5 = arith.constant 5 : index
    %c0_5 = arith.constant 0 : index
    %5 = vector.load %arg18[%c5, %c0_5] : memref<8x128xf32, #tpu.memory_space<vmem>>, vector<1x128xf32>
    %c6 = arith.constant 6 : index
    %c0_6 = arith.constant 0 : index
    %6 = vector.load %arg18[%c6, %c0_6] : memref<8x128xf32, #tpu.memory_space<vmem>>, vector<1x128xf32>
    %c0_7 = arith.constant 0 : index
    %c0_8 = arith.constant 0 : index
    %c0_9 = arith.constant 0 : index
    %7 = vector.load %arg1[%c0_7, %c0_8, %c0_9] : memref<1x8x256xbf16, #tpu.memory_space<vmem>>, vector<1x8x256xbf16>
    %8 = vector.shape_cast %7 : vector<1x8x256xbf16> to vector<8x256xbf16>
    %c0_10 = arith.constant 0 : index
    %c0_11 = arith.constant 0 : index
    %9 = vector.load %arg7[%c0_10, %c0_11] : memref<256x128xbf16, #tpu.memory_space<vmem>>, vector<256x128xbf16>
    %cst = arith.constant dense<0.000000e+00> : vector<8x128xf32>
    %10 = tpu.matmul %8, %9, %cst {dimension_numbers = #tpu.dot_dimension_numbers<[1], [0], [0], [1], [0, 0, 1, 1], [], []>} : vector<8x256xbf16>, vector<256x128xbf16>, vector<8x128xf32> -> vector<8x128xf32>
    %11 = vector.broadcast %0 : vector<1x128xf32> to vector<8x128xf32>
    %12 = arith.addf %10, %11 : vector<8x128xf32>
    %c0_12 = arith.constant 0 : index
    %c0_13 = arith.constant 0 : index
    %13 = vector.load %arg4[%c0_12, %c0_13] : memref<8x128xf32, #tpu.memory_space<vmem>>, vector<8x128xf32>
    %14 = vector.shape_cast %13 : vector<8x128xf32> to vector<1x8x128xf32>
    %15 = vector.shape_cast %14 : vector<1x8x128xf32> to vector<8x128xf32>
    %c0_14 = arith.constant 0 : index
    %c0_15 = arith.constant 0 : index
    %16 = vector.load %arg5[%c0_14, %c0_15] : memref<8x128xf32, #tpu.memory_space<vmem>>, vector<8x128xf32>
    %17 = vector.shape_cast %16 : vector<8x128xf32> to vector<1x8x128xf32>
    %18 = vector.shape_cast %17 : vector<1x8x128xf32> to vector<8x128xf32>
    %c0_16 = arith.constant 0 : index
    %c0_17 = arith.constant 0 : index
    %19 = vector.load %arg6[%c0_16, %c0_17] : memref<8x128xf32, #tpu.memory_space<vmem>>, vector<8x128xf32>
    %20 = vector.shape_cast %19 : vector<8x128xf32> to vector<1x8x128xf32>
    %21 = vector.shape_cast %20 : vector<1x8x128xf32> to vector<8x128xf32>
    %22 = arith.mulf %12, %15 : vector<8x128xf32>
    %23 = arith.mulf %12, %18 : vector<8x128xf32>
    %c127_i32 = arith.constant 127 : i32
    %24 = tpu.dynamic_rotate %23 by %c127_i32 dim 1 : vector<8x128xf32>, i32 -> vector<8x128xf32>
    %25 = arith.addf %22, %24 : vector<8x128xf32>
    %26 = arith.mulf %12, %21 : vector<8x128xf32>
    %c1_i32 = arith.constant 1 : i32
    %27 = tpu.dynamic_rotate %26 by %c1_i32 dim 1 : vector<8x128xf32>, i32 -> vector<8x128xf32>
    %28 = arith.addf %25, %27 : vector<8x128xf32>
    %c0_18 = arith.constant 0 : index
    %c0_19 = arith.constant 0 : index
    %c0_20 = arith.constant 0 : index
    %29 = vector.load %arg3[%c0_18, %c0_19, %c0_20] : memref<1x1x128xf32, #tpu.memory_space<vmem>>, vector<1x1x128xf32>
    %30 = vector.shape_cast %29 : vector<1x1x128xf32> to vector<1x1x128xf32>
    %31 = vector.broadcast %30 : vector<1x1x128xf32> to vector<1x8x128xf32>
    %32 = vector.shape_cast %31 : vector<1x8x128xf32> to vector<8x128xf32>
    %33 = arith.addf %28, %32 : vector<8x128xf32>
    %34 = arith.truncf %33 : vector<8x128xf32> to vector<8x128xbf16>
    %c0_21 = arith.constant 0 : index
    %c0_22 = arith.constant 0 : index
    %35 = vector.load %arg8[%c0_21, %c0_22] : memref<128x384xbf16, #tpu.memory_space<vmem>>, vector<128x384xbf16>
    %cst_23 = arith.constant dense<0.000000e+00> : vector<8x384xf32>
    %36 = tpu.matmul %34, %35, %cst_23 {dimension_numbers = #tpu.dot_dimension_numbers<[1], [0], [0], [1], [0, 0, 1, 1], [], []>} : vector<8x128xbf16>, vector<128x384xbf16>, vector<8x384xf32> -> vector<8x384xf32>
    %c0_24 = arith.constant 0 : index
    %c0_25 = arith.constant 0 : index
    %37 = vector.load %arg9[%c0_24, %c0_25] : memref<1x384xf32, #tpu.memory_space<vmem>>, vector<1x384xf32>
    %38 = vector.broadcast %37 : vector<1x384xf32> to vector<8x384xf32>
    %39 = arith.addf %36, %38 : vector<8x384xf32>
    %c0_26 = arith.constant 0 : index
    %c0_27 = arith.constant 0 : index
    %c0_28 = arith.constant 0 : index
    %40 = vector.load %arg2[%c0_26, %c0_27, %c0_28] : memref<1x8x128xbf16, #tpu.memory_space<vmem>>, vector<1x8x128xbf16>
    %41 = vector.shape_cast %40 : vector<1x8x128xbf16> to vector<8x128xbf16>
    %c0_29 = arith.constant 0 : index
    %c0_30 = arith.constant 0 : index
    %42 = vector.load %arg10[%c0_29, %c0_30] : memref<128x256xbf16, #tpu.memory_space<vmem>>, vector<128x256xbf16>
    %cst_31 = arith.constant dense<0.000000e+00> : vector<8x256xf32>
    %43 = tpu.matmul %41, %42, %cst_31 {dimension_numbers = #tpu.dot_dimension_numbers<[1], [0], [0], [1], [0, 0, 1, 1], [], []>} : vector<8x128xbf16>, vector<128x256xbf16>, vector<8x256xf32> -> vector<8x256xf32>
    %c0_32 = arith.constant 0 : index
    %c0_33 = arith.constant 0 : index
    %44 = vector.load %arg11[%c0_32, %c0_33] : memref<1x256xf32, #tpu.memory_space<vmem>>, vector<1x256xf32>
    %45 = vector.broadcast %44 : vector<1x256xf32> to vector<8x256xf32>
    %46 = arith.addf %43, %45 : vector<8x256xf32>
    %47 = vector.extract_strided_slice %39 {offsets = [0, 0], sizes = [8, 128], strides = [1, 1]} : vector<8x384xf32> to vector<8x128xf32>
    %48 = vector.shape_cast %47 : vector<8x128xf32> to vector<1x8x128xf32>
    %49 = vector.extract_strided_slice %39 {offsets = [0, 128], sizes = [8, 128], strides = [1, 1]} : vector<8x384xf32> to vector<8x128xf32>
    %50 = vector.shape_cast %49 : vector<8x128xf32> to vector<1x8x128xf32>
    %51 = vector.extract_strided_slice %39 {offsets = [0, 256], sizes = [8, 128], strides = [1, 1]} : vector<8x384xf32> to vector<8x128xf32>
    %52 = vector.shape_cast %51 : vector<8x128xf32> to vector<1x8x128xf32>
    %53 = vector.extract_strided_slice %46 {offsets = [0, 0], sizes = [8, 128], strides = [1, 1]} : vector<8x256xf32> to vector<8x128xf32>
    %54 = vector.shape_cast %53 : vector<8x128xf32> to vector<1x8x128xf32>
    %55 = vector.extract_strided_slice %46 {offsets = [0, 128], sizes = [8, 128], strides = [1, 1]} : vector<8x256xf32> to vector<8x128xf32>
    %56 = vector.shape_cast %55 : vector<8x128xf32> to vector<1x8x128xf32>
    %57 = arith.truncf %48 : vector<1x8x128xf32> to vector<1x8x128xbf16>
    %58 = arith.truncf %54 : vector<1x8x128xf32> to vector<1x8x128xbf16>
    "tpu.trace_start"() <{level = 10 : i32, message = "bqd,bkd->bqk"}> : () -> ()
    %cst_34 = arith.constant dense<0.000000e+00> : vector<1x8x8xf32>
    %59 = tpu.matmul %57, %58, %cst_34 {dimension_numbers = #tpu.dot_dimension_numbers<[2], [2], [1], [1], [0, 0, 0, 1, 1, 1], [0], [0]>} : vector<1x8x128xbf16>, vector<1x8x128xbf16>, vector<1x8x8xf32> -> vector<1x8x8xf32>
    "tpu.trace_stop"() : () -> ()
    %60 = arith.truncf %50 : vector<1x8x128xf32> to vector<1x8x128xbf16>
    "tpu.trace_start"() <{level = 10 : i32, message = "bqd,bkd->bqk"}> : () -> ()
    %cst_35 = arith.constant dense<0.000000e+00> : vector<1x8x8xf32>
    %61 = tpu.matmul %57, %60, %cst_35 {dimension_numbers = #tpu.dot_dimension_numbers<[2], [2], [1], [1], [0, 0, 0, 1, 1, 1], [0], [0]>} : vector<1x8x128xbf16>, vector<1x8x128xbf16>, vector<1x8x8xf32> -> vector<1x8x8xf32>
    "tpu.trace_stop"() : () -> ()
    %62 = tpu.concatenate %59, %61 in 2 : vector<1x8x8xf32>, vector<1x8x8xf32> -> vector<1x8x16xf32>
    %cst_36 = arith.constant dense<0xFF800000> : vector<1x8xf32>
    %63 = vector.multi_reduction <maximumf>, %62, %cst_36 [2] : vector<1x8x16xf32> to vector<1x8xf32>
    %64 = vector.shape_cast %63 : vector<1x8xf32> to vector<1x8x1xf32>
    %65 = vector.broadcast %64 : vector<1x8x1xf32> to vector<1x8x16xf32>
    %66 = arith.subf %62, %65 : vector<1x8x16xf32>
    %67 = math.exp %66 : vector<1x8x16xf32>
    %cst_37 = arith.constant dense<0.000000e+00> : vector<1x8xf32>
    %68 = vector.multi_reduction <add>, %67, %cst_37 [2] : vector<1x8x16xf32> to vector<1x8xf32>
    %69 = vector.shape_cast %68 : vector<1x8xf32> to vector<1x8x1xf32>
    %70 = tpu.reciprocal %69 {approx = true} : vector<1x8x1xf32> -> vector<1x8x1xf32>
    %71 = vector.broadcast %70 : vector<1x8x1xf32> to vector<1x8x16xf32>
    %72 = arith.mulf %67, %71 : vector<1x8x16xf32>
    %73 = arith.truncf %72 : vector<1x8x16xf32> to vector<1x8x16xbf16>
    %74 = vector.extract_strided_slice %73 {offsets = [0, 0, 0], sizes = [1, 8, 8], strides = [1, 1, 1]} : vector<1x8x16xbf16> to vector<1x8x8xbf16>
    %75 = arith.truncf %56 : vector<1x8x128xf32> to vector<1x8x128xbf16>
    "tpu.trace_start"() <{level = 10 : i32, message = "bqk,bkd->bqd"}> : () -> ()
    %cst_38 = arith.constant dense<0.000000e+00> : vector<1x8x128xf32>
    %76 = tpu.matmul %74, %75, %cst_38 {dimension_numbers = #tpu.dot_dimension_numbers<[2], [1], [1], [2], [0, 0, 0, 1, 1, 2], [0], [0]>} : vector<1x8x8xbf16>, vector<1x8x128xbf16>, vector<1x8x128xf32> -> vector<1x8x128xf32>
    "tpu.trace_stop"() : () -> ()
    %77 = vector.extract_strided_slice %73 {offsets = [0, 0, 8], sizes = [1, 8, 8], strides = [1, 1, 1]} : vector<1x8x16xbf16> to vector<1x8x8xbf16>
    %78 = arith.truncf %52 : vector<1x8x128xf32> to vector<1x8x128xbf16>
    "tpu.trace_start"() <{level = 10 : i32, message = "bqk,bkd->bqd"}> : () -> ()
    %cst_39 = arith.constant dense<0.000000e+00> : vector<1x8x128xf32>
    %79 = tpu.matmul %77, %78, %cst_39 {dimension_numbers = #tpu.dot_dimension_numbers<[2], [1], [1], [2], [0, 0, 0, 1, 1, 2], [0], [0]>} : vector<1x8x8xbf16>, vector<1x8x128xbf16>, vector<1x8x128xf32> -> vector<1x8x128xf32>
    "tpu.trace_stop"() : () -> ()
    %80 = arith.addf %76, %79 : vector<1x8x128xf32>
    %81 = vector.shape_cast %80 : vector<1x8x128xf32> to vector<8x128xf32>
    %82 = arith.truncf %81 : vector<8x128xf32> to vector<8x128xbf16>
    %c0_40 = arith.constant 0 : index
    %c0_41 = arith.constant 0 : index
    %83 = vector.load %arg12[%c0_40, %c0_41] : memref<128x128xbf16, #tpu.memory_space<vmem>>, vector<128x128xbf16>
    %cst_42 = arith.constant dense<0.000000e+00> : vector<8x128xf32>
    %84 = tpu.matmul %82, %83, %cst_42 {dimension_numbers = #tpu.dot_dimension_numbers<[1], [0], [0], [1], [0, 0, 1, 1], [], []>} : vector<8x128xbf16>, vector<128x128xbf16>, vector<8x128xf32> -> vector<8x128xf32>
    %85 = vector.broadcast %1 : vector<1x128xf32> to vector<8x128xf32>
    %86 = arith.addf %84, %85 : vector<8x128xf32>
    %87 = arith.addf %33, %86 : vector<8x128xf32>
    %cst_43 = arith.constant dense<0.000000e+00> : vector<8xf32>
    %88 = vector.multi_reduction <add>, %87, %cst_43 [1] : vector<8x128xf32> to vector<8xf32>
    %89 = vector.shape_cast %88 : vector<8xf32> to vector<8x1xf32>
    %cst_44 = arith.constant 1.280000e+02 : f32
    %90 = vector.broadcast %cst_44 : f32 to vector<8x1xf32>
    %91 = arith.divf %89, %90 : vector<8x1xf32>
    %92 = vector.broadcast %91 : vector<8x1xf32> to vector<8x128xf32>
    %93 = arith.subf %87, %92 : vector<8x128xf32>
    %94 = arith.mulf %93, %93 : vector<8x128xf32>
    %cst_45 = arith.constant dense<0.000000e+00> : vector<8xf32>
    %95 = vector.multi_reduction <add>, %94, %cst_45 [1] : vector<8x128xf32> to vector<8xf32>
    %96 = vector.shape_cast %95 : vector<8xf32> to vector<8x1xf32>
    %cst_46 = arith.constant 1.280000e+02 : f32
    %97 = vector.broadcast %cst_46 : f32 to vector<8x1xf32>
    %98 = arith.divf %96, %97 : vector<8x1xf32>
    %99 = vector.broadcast %91 : vector<8x1xf32> to vector<8x128xf32>
    %100 = arith.subf %87, %99 : vector<8x128xf32>
    %cst_47 = arith.constant 9.99999974E-6 : f32
    %101 = vector.broadcast %cst_47 : f32 to vector<8x1xf32>
    %102 = arith.addf %98, %101 : vector<8x1xf32>
    %103 = math.rsqrt %102 : vector<8x1xf32>
    %104 = vector.broadcast %103 : vector<8x1xf32> to vector<8x128xf32>
    %105 = arith.mulf %100, %104 : vector<8x128xf32>
    %106 = vector.broadcast %3 : vector<1x128xf32> to vector<8x128xf32>
    %107 = arith.mulf %105, %106 : vector<8x128xf32>
    %108 = vector.broadcast %4 : vector<1x128xf32> to vector<8x128xf32>
    %109 = arith.addf %107, %108 : vector<8x128xf32>
    %110 = arith.truncf %109 : vector<8x128xf32> to vector<8x128xbf16>
    %c0_48 = arith.constant 0 : index
    %c0_49 = arith.constant 0 : index
    %111 = vector.load %arg13[%c0_48, %c0_49] : memref<128x512xbf16, #tpu.memory_space<vmem>>, vector<128x512xbf16>
    %cst_50 = arith.constant dense<0.000000e+00> : vector<8x512xf32>
    %112 = tpu.matmul %110, %111, %cst_50 {dimension_numbers = #tpu.dot_dimension_numbers<[1], [0], [0], [1], [0, 0, 1, 1], [], []>} : vector<8x128xbf16>, vector<128x512xbf16>, vector<8x512xf32> -> vector<8x512xf32>
    %c0_51 = arith.constant 0 : index
    %c0_52 = arith.constant 0 : index
    %113 = vector.load %arg14[%c0_51, %c0_52] : memref<1x512xf32, #tpu.memory_space<vmem>>, vector<1x512xf32>
    %114 = vector.broadcast %113 : vector<1x512xf32> to vector<8x512xf32>
    %115 = arith.addf %112, %114 : vector<8x512xf32>
    %cst_53 = arith.constant 5.000000e-01 : f32
    %116 = vector.broadcast %cst_53 : f32 to vector<8x512xf32>
    %117 = arith.mulf %116, %115 : vector<8x512xf32>
    %cst_54 = arith.constant 0.707106769 : f32
    %118 = vector.broadcast %cst_54 : f32 to vector<8x512xf32>
    %119 = arith.mulf %115, %118 : vector<8x512xf32>
    %120 = math.erf %119 : vector<8x512xf32>
    %cst_55 = arith.constant 1.000000e+00 : f32
    %121 = vector.broadcast %cst_55 : f32 to vector<8x512xf32>
    %122 = arith.addf %121, %120 : vector<8x512xf32>
    %123 = arith.mulf %117, %122 : vector<8x512xf32>
    %124 = arith.truncf %123 : vector<8x512xf32> to vector<8x512xbf16>
    %c0_56 = arith.constant 0 : index
    %c0_57 = arith.constant 0 : index
    %125 = vector.load %arg15[%c0_56, %c0_57] : memref<512x128xbf16, #tpu.memory_space<vmem>>, vector<512x128xbf16>
    %cst_58 = arith.constant dense<0.000000e+00> : vector<8x128xf32>
    %126 = tpu.matmul %124, %125, %cst_58 {dimension_numbers = #tpu.dot_dimension_numbers<[1], [0], [0], [1], [0, 0, 1, 1], [], []>} : vector<8x512xbf16>, vector<512x128xbf16>, vector<8x128xf32> -> vector<8x128xf32>
    %127 = vector.broadcast %2 : vector<1x128xf32> to vector<8x128xf32>
    %128 = arith.addf %126, %127 : vector<8x128xf32>
    %129 = arith.addf %109, %128 : vector<8x128xf32>
    %cst_59 = arith.constant dense<0.000000e+00> : vector<8xf32>
    %130 = vector.multi_reduction <add>, %129, %cst_59 [1] : vector<8x128xf32> to vector<8xf32>
    %131 = vector.shape_cast %130 : vector<8xf32> to vector<8x1xf32>
    %cst_60 = arith.constant 1.280000e+02 : f32
    %132 = vector.broadcast %cst_60 : f32 to vector<8x1xf32>
    %133 = arith.divf %131, %132 : vector<8x1xf32>
    %134 = vector.broadcast %133 : vector<8x1xf32> to vector<8x128xf32>
    %135 = arith.subf %129, %134 : vector<8x128xf32>
    %136 = arith.mulf %135, %135 : vector<8x128xf32>
    %cst_61 = arith.constant dense<0.000000e+00> : vector<8xf32>
    %137 = vector.multi_reduction <add>, %136, %cst_61 [1] : vector<8x128xf32> to vector<8xf32>
    %138 = vector.shape_cast %137 : vector<8xf32> to vector<8x1xf32>
    %cst_62 = arith.constant 1.280000e+02 : f32
    %139 = vector.broadcast %cst_62 : f32 to vector<8x1xf32>
    %140 = arith.divf %138, %139 : vector<8x1xf32>
    %141 = vector.broadcast %133 : vector<8x1xf32> to vector<8x128xf32>
    %142 = arith.subf %129, %141 : vector<8x128xf32>
    %cst_63 = arith.constant 9.99999974E-6 : f32
    %143 = vector.broadcast %cst_63 : f32 to vector<8x1xf32>
    %144 = arith.addf %140, %143 : vector<8x1xf32>
    %145 = math.rsqrt %144 : vector<8x1xf32>
    %146 = vector.broadcast %145 : vector<8x1xf32> to vector<8x128xf32>
    %147 = arith.mulf %142, %146 : vector<8x128xf32>
    %148 = vector.broadcast %5 : vector<1x128xf32> to vector<8x128xf32>
    %149 = arith.mulf %147, %148 : vector<8x128xf32>
    %150 = vector.broadcast %6 : vector<1x128xf32> to vector<8x128xf32>
    %151 = arith.addf %149, %150 : vector<8x128xf32>
    %152 = arith.truncf %151 : vector<8x128xf32> to vector<8x128xbf16>
    %c0_64 = arith.constant 0 : index
    %c0_65 = arith.constant 0 : index
    %153 = vector.load %arg16[%c0_64, %c0_65] : memref<128x256xbf16, #tpu.memory_space<vmem>>, vector<128x256xbf16>
    %cst_66 = arith.constant dense<0.000000e+00> : vector<8x256xf32>
    %154 = tpu.matmul %152, %153, %cst_66 {dimension_numbers = #tpu.dot_dimension_numbers<[1], [0], [0], [1], [0, 0, 1, 1], [], []>} : vector<8x128xbf16>, vector<128x256xbf16>, vector<8x256xf32> -> vector<8x256xf32>
    %c0_67 = arith.constant 0 : index
    %c0_68 = arith.constant 0 : index
    %155 = vector.load %arg17[%c0_67, %c0_68] : memref<1x256xf32, #tpu.memory_space<vmem>>, vector<1x256xf32>
    %156 = vector.broadcast %155 : vector<1x256xf32> to vector<8x256xf32>
    %157 = arith.addf %154, %156 : vector<8x256xf32>
    %158 = vector.shape_cast %157 : vector<8x256xf32> to vector<1x8x256xf32>
    %c0_69 = arith.constant 0 : index
    %c0_70 = arith.constant 0 : index
    %c0_71 = arith.constant 0 : index
    %159 = vector.load %arg19[%c0_69, %c0_70, %c0_71] : memref<1x8x256xf32, #tpu.memory_space<vmem>>, vector<1x8x256xf32>
    tpu.vector_store %arg19[%c0_69, %c0_70, %c0_71], %158 {strides = array<i32>} : memref<1x8x256xf32, #tpu.memory_space<vmem>>, vector<1x8x256xf32>,
    return
  }
  func.func @transform_0(%arg0: i32) -> (i32, i32, i32) {
    %c0_i32 = arith.constant 0 : i32
    %c0_i32_0 = arith.constant 0 : i32
    %c0_i32_1 = arith.constant 0 : i32
    return %arg0, %c0_i32, %c0_i32_0 : i32, i32, i32
  }
  func.func @transform_1(%arg0: i32) -> (i32, i32, i32) {
    %c0_i32 = arith.constant 0 : i32
    %c0_i32_0 = arith.constant 0 : i32
    %c0_i32_1 = arith.constant 0 : i32
    return %arg0, %c0_i32, %c0_i32_0 : i32, i32, i32
  }
  func.func @transform_2(%arg0: i32) -> (i32, i32, i32) {
    %c0_i32 = arith.constant 0 : i32
    %c0_i32_0 = arith.constant 0 : i32
    %c0_i32_1 = arith.constant 0 : i32
    return %arg0, %c0_i32, %c0_i32_0 : i32, i32, i32
  }
  func.func @transform_3(%arg0: i32) -> (i32, i32) {
    %c0_i32 = arith.constant 0 : i32
    %c0_i32_0 = arith.constant 0 : i32
    %c0_i32_1 = arith.constant 0 : i32
    return %c0_i32, %c0_i32_0 : i32, i32
  }
  func.func @transform_4(%arg0: i32) -> (i32, i32) {
    %c0_i32 = arith.constant 0 : i32
    %c0_i32_0 = arith.constant 0 : i32
    %c0_i32_1 = arith.constant 0 : i32
    return %c0_i32, %c0_i32_0 : i32, i32
  }
  func.func @transform_5(%arg0: i32) -> (i32, i32) {
    %c0_i32 = arith.constant 0 : i32
    %c0_i32_0 = arith.constant 0 : i32
    %c0_i32_1 = arith.constant 0 : i32
    return %c0_i32, %c0_i32_0 : i32, i32
  }
  func.func @transform_6(%arg0: i32) -> (i32, i32) {
    %c0_i32 = arith.constant 0 : i32
    %c0_i32_0 = arith.constant 0 : i32
    %c0_i32_1 = arith.constant 0 : i32
    return %c0_i32, %c0_i32_0 : i32, i32
  }
  func.func @transform_7(%arg0: i32) -> (i32, i32) {
    %c0_i32 = arith.constant 0 : i32
    %c0_i32_0 = arith.constant 0 : i32
    %c0_i32_1 = arith.constant 0 : i32
    return %c0_i32, %c0_i32_0 : i32, i32
  }
  func.func @transform_8(%arg0: i32) -> (i32, i32) {
    %c0_i32 = arith.constant 0 : i32
    %c0_i32_0 = arith.constant 0 : i32
    %c0_i32_1 = arith.constant 0 : i32
    return %c0_i32, %c0_i32_0 : i32, i32
  }
  func.func @transform_9(%arg0: i32) -> (i32, i32) {
    %c0_i32 = arith.constant 0 : i32
    %c0_i32_0 = arith.constant 0 : i32
    %c0_i32_1 = arith.constant 0 : i32
    return %c0_i32, %c0_i32_0 : i32, i32
  }
  func.func @transform_10(%arg0: i32) -> (i32, i32) {
    %c0_i32 = arith.constant 0 : i32
    %c0_i32_0 = arith.constant 0 : i32
    %c0_i32_1 = arith.constant 0 : i32
    return %c0_i32, %c0_i32_0 : i32, i32
  }
  func.func @transform_11(%arg0: i32) -> (i32, i32) {
    %c0_i32 = arith.constant 0 : i32
    %c0_i32_0 = arith.constant 0 : i32
    %c0_i32_1 = arith.constant 0 : i32
    return %c0_i32, %c0_i32_0 : i32, i32
  }
  func.func @transform_12(%arg0: i32) -> (i32, i32) {
    %c0_i32 = arith.constant 0 : i32
    %c0_i32_0 = arith.constant 0 : i32
    %c0_i32_1 = arith.constant 0 : i32
    return %c0_i32, %c0_i32_0 : i32, i32
  }
  func.func @transform_13(%arg0: i32) -> (i32, i32) {
    %c0_i32 = arith.constant 0 : i32
    %c0_i32_0 = arith.constant 0 : i32
    %c0_i32_1 = arith.constant 0 : i32
    return %c0_i32, %c0_i32_0 : i32, i32
  }
  func.func @transform_14(%arg0: i32) -> (i32, i32) {
    %c0_i32 = arith.constant 0 : i32
    %c0_i32_0 = arith.constant 0 : i32
    %c0_i32_1 = arith.constant 0 : i32
    return %c0_i32, %c0_i32_0 : i32, i32
  }
  func.func @transform_15(%arg0: i32) -> (i32, i32) {
    %c0_i32 = arith.constant 0 : i32
    %c0_i32_0 = arith.constant 0 : i32
    %c0_i32_1 = arith.constant 0 : i32
    return %c0_i32, %c0_i32_0 : i32, i32
  }
  func.func @transform_16(%arg0: i32) -> (i32, i32) {
    %c0_i32 = arith.constant 0 : i32
    %c0_i32_0 = arith.constant 0 : i32
    %c0_i32_1 = arith.constant 0 : i32
    return %c0_i32, %c0_i32_0 : i32, i32
  }
  func.func @transform_17(%arg0: i32) -> (i32, i32) {
    %c0_i32 = arith.constant 0 : i32
    %c0_i32_0 = arith.constant 0 : i32
    %c0_i32_1 = arith.constant 0 : i32
    return %c0_i32, %c0_i32_0 : i32, i32
  }
  func.func @transform_18(%arg0: i32) -> (i32, i32, i32) {
    %c0_i32 = arith.constant 0 : i32
    %c0_i32_0 = arith.constant 0 : i32
    %c0_i32_1 = arith.constant 0 : i32
    return %arg0, %c0_i32, %c0_i32_0 : i32, i32, i32
  }
}

</mosaic_0001>

<llo_original>
// kernel: tpu_custom_call.1
$region0: #{tpu_custom_call.1}
  #allocation0 [shape = 'u32[]', space=smem, size = 0x4, offset = 0x4, fixed_abs, tag = 'smem constant byte address 0x4 - core index']
  #allocation1 [shape = 'u32[144,128]{1,0:T(1,128)}', space=vmem, size = 0x12000, scoped, tag = 'internal scratch']
  %s0 = inlined_call_operand.hbm [shape: bf16[2,8,256], index: 0, kind: input, shape index: {}]
  %s1 = inlined_call_operand.hbm [shape: bf16[2,8,128], index: 1, kind: input, shape index: {}]
  %s2 = inlined_call_operand.hbm [shape: f32[2,1,128], index: 2, kind: input, shape index: {}]
  %s3 = inlined_call_operand.hbm [shape: f32[8,128], index: 3, kind: input, shape index: {}]
  %s4 = inlined_call_operand.hbm [shape: f32[8,128], index: 4, kind: input, shape index: {}]
  %s5 = inlined_call_operand.vmem [shape: f32[8,128], index: 5, kind: input, shape index: {}]
  %s6 = inlined_call_operand.hbm [shape: bf16[256,128], index: 6, kind: input, shape index: {}]
  %s7 = inlined_call_operand.hbm [shape: bf16[128,384], index: 7, kind: input, shape index: {}]
  %s8 = inlined_call_operand.hbm [shape: f32[1,384], index: 8, kind: input, shape index: {}]
  %s9 = inlined_call_operand.hbm [shape: bf16[128,256], index: 9, kind: input, shape index: {}]
  %s10 = inlined_call_operand.hbm [shape: f32[1,256], index: 10, kind: input, shape index: {}]
  %s11 = inlined_call_operand.hbm [shape: bf16[128,128], index: 11, kind: input, shape index: {}]
  %s12 = inlined_call_operand.hbm [shape: bf16[128,512], index: 12, kind: input, shape index: {}]
  %s13 = inlined_call_operand.vmem [shape: f32[1,512], index: 13, kind: input, shape index: {}]
  %s14 = inlined_call_operand.hbm [shape: bf16[512,128], index: 14, kind: input, shape index: {}]
  %s15 = inlined_call_operand.hbm [shape: bf16[128,256], index: 15, kind: input, shape index: {}]
  %s16 = inlined_call_operand.vmem [shape: f32[1,256], index: 16, kind: input, shape index: {}]
  %s17 = inlined_call_operand.vmem [shape: f32[8,128], index: 17, kind: input, shape index: {}]
  %s18 = inlined_call_operand.hbm [shape: f32[2,8,256], index: 18, kind: output, shape index: {}]
  %s19 = sld [smem:[#allocation0]]
  $region161: #{tpu_custom_call.1} parent=0
    _
  %s21 = ssub.s32 1, %s19
  %s22 = scalar_select 0, %s21, %s19
  $region1: #{tpu_custom_call.1} parent=0
    #allocation2 [shape = 'u8[8192]{0}', space=vmem, size = 0x2000, scoped, tag = 'input window, operand 0']
    #allocation3 [shape = 's32[2]{0}', space=sflag, size = 0x8, scoped, tag = 'scoped memory for tpu_custom_call.1']
    #allocation4 [shape = 's32[2]{0}', space=sflag, size = 0x8, scoped, tag = 'scoped memory for tpu_custom_call.1']
    #allocation5 [shape = 'u8[4096]{0}', space=vmem, size = 0x1000, scoped, tag = 'input window, operand 1']
    #allocation6 [shape = 's32[2]{0}', space=sflag, size = 0x8, scoped, tag = 'scoped memory for tpu_custom_call.1']
    #allocation7 [shape = 'u8[1024]{0}', space=vmem, size = 0x400, scoped, tag = 'input window, operand 2']
    #allocation8 [shape = 'u8[4096]{0}', space=vmem, size = 0x1000, scoped, tag = 'input window, operand 3, single buffered']
    #allocation9 [shape = 's32[1]{0}', space=sflag, size = 0x4, scoped, tag = 'scoped memory for tpu_custom_call.1']
    #allocation10 [shape = 'u8[4096]{0}', space=vmem, size = 0x1000, scoped, tag = 'input window, operand 4, single buffered']
    #allocation11 [shape = 'u8[65536]{0}', space=vmem, size = 0x10000, scoped, tag = 'input window, operand 6, single buffered']
    #allocation12 [shape = 's32[1]{0}', space=sflag, size = 0x4, scoped, tag = 'scoped memory for tpu_custom_call.1']
    #allocation13 [shape = 'u8[98304]{0}', space=vmem, size = 0x18000, scoped, tag = 'input window, operand 7, single buffered']
    #allocation14 [shape = 'u8[1536]{0}', space=vmem, size = 0x800, scoped, tag = 'input window, operand 8, single buffered']
    #allocation15 [shape = 's32[1]{0}', space=sflag, size = 0x4, scoped, tag = 'scoped memory for tpu_custom_call.1']
    #allocation16 [shape = 'u8[65536]{0}', space=vmem, size = 0x10000, scoped, tag = 'input window, operand 9, single buffered']
    #allocation17 [shape = 'u8[1024]{0}', space=vmem, size = 0x400, scoped, tag = 'input window, operand 10, single buffered']
    #allocation18 [shape = 's32[1]{0}', space=sflag, size = 0x4, scoped, tag = 'scoped memory for tpu_custom_call.1']
    #allocation19 [shape = 'u8[32768]{0}', space=vmem, size = 0x8000, scoped, tag = 'input window, operand 11, single buffered']
    #allocation20 [shape = 'u8[131072]{0}', space=vmem, size = 0x20000, scoped, tag = 'input window, operand 12, single buffered']
    #allocation21 [shape = 's32[1]{0}', space=sflag, size = 0x4, scoped, tag = 'scoped memory for tpu_custom_call.1']
    #allocation22 [shape = 'u8[131072]{0}', space=vmem, size = 0x20000, scoped, tag = 'input window, operand 14, single buffered']
    #allocation23 [shape = 'u8[65536]{0}', space=vmem, size = 0x10000, scoped, tag = 'input window, operand 15, single buffered']
    #allocation24 [shape = 's32[1]{0}', space=sflag, size = 0x4, scoped, tag = 'scoped memory for tpu_custom_call.1']
    #allocation25 [shape = 'u8[16384]{0}', space=vmem, size = 0x4000, scoped, tag = 'output window, operand 0']
    %23 = vsyncpa [#allocation3], 0
    %s24 = scalar_lea.sflag [#allocation3], 1
    %25 = vsyncpa %s24, 0
    %26 = vsyncpa [#allocation6], 0
    %s27 = scalar_lea.sflag [#allocation6], 1
    %28 = vsyncpa %s27, 0
    %29 = vsyncpa [#allocation9], 0
    %30 = vsyncpa [#allocation12], 0
    %31 = vsyncpa [#allocation15], 0
    %32 = vsyncpa [#allocation18], 0
    %33 = vsyncpa [#allocation21], 0
    %34 = vsyncpa [#allocation24], 0
    %35 = vsyncpa [#allocation4], 0
    %s36 = scalar_lea.sflag [#allocation4], 1
    %37 = vsyncpa %s36, 0
    loop: start=0, step=1, limit=4
    $region2: #{tpu_custom_call.1} parent=1 // loop_pre_header
      _
    $region3: #{tpu_custom_call.1} parent=1 // loop_header
      %s39 = sphi 0, %s43
      %p40 = scmp.ge.s32.totalorder %s39, 4
      %s49 = sphi 0, %s51
      %s52 = sphi 0, %s49
      %s53 = sphi 0, %s52
      %s69 = sphi 0, %s53
      %s75 = sphi 0, %s77
      %s78 = sphi 0, %s75
      %s79 = sphi 0, %s78
      %s95 = sphi 0, %s79
      %s101 = sphi 0, %s103
      %s104 = sphi 0, %s101
      %s105 = sphi 0, %s104
      %s121 = sphi 0, %s105
      %s125 = sphi 0, %s125
      %s127 = sphi 0, %s125
      %s128 = sphi 0, %s127
      %s142 = sphi 0, %s128
      %s146 = sphi 0, %s146
      %s148 = sphi 0, %s146
      %s149 = sphi 0, %s148
      %s163 = sphi 0, %s149
      %s167 = sphi 0, %s167
      %s169 = sphi 0, %s167
      %s170 = sphi 0, %s169
      %s184 = sphi 0, %s170
      %s188 = sphi 0, %s188
      %s190 = sphi 0, %s188
      %s191 = sphi 0, %s190
      %s205 = sphi 0, %s191
      %s209 = sphi 0, %s209
      %s211 = sphi 0, %s209
      %s212 = sphi 0, %s211
      %s226 = sphi 0, %s212
      %s230 = sphi 0, %s230
      %s232 = sphi 0, %s230
      %s233 = sphi 0, %s232
      %s247 = sphi 0, %s233
      %s251 = sphi 0, %s251
      %s253 = sphi 0, %s251
      %s254 = sphi 0, %s253
      %s268 = sphi 0, %s254
      %s272 = sphi 0, %s272
      %s274 = sphi 0, %s272
      %s275 = sphi 0, %s274
      %s289 = sphi 0, %s275
      %s293 = sphi 0, %s293
      %s295 = sphi 0, %s293
      %s296 = sphi 0, %s295
      %s310 = sphi 0, %s296
      %s314 = sphi 0, %s314
      %s316 = sphi 0, %s314
      %s317 = sphi 0, %s316
      %s331 = sphi 0, %s317
      %s335 = sphi 0, %s335
      %s337 = sphi 0, %s335
      %s338 = sphi 0, %s337
      %s352 = sphi 0, %s338
      %s356 = sphi 0, %s356
      %s358 = sphi 0, %s356
      %s359 = sphi 0, %s358
      %s373 = sphi 0, %s359
      %s377 = sphi 0, %s377
      %s379 = sphi 0, %s377
      %s380 = sphi 0, %s379
      %s394 = sphi 0, %s380
      %s398 = sphi 0, %s398
      %s400 = sphi 0, %s398
      %s401 = sphi 0, %s400
      %s415 = sphi 0, %s401
      %s419 = sphi 0, %s419
      %s421 = sphi 0, %s419
      %s422 = sphi 0, %s421
      %s436 = sphi 0, %s422
      %s442 = sphi 0, %s444
      %s445 = sphi 0, %s442
      %s446 = sphi 0, %s445
      %s462 = sphi 0, %s446
    $region4: #{tpu_custom_call.1} parent=1 // loop_header_branch
      %42 = sbr.rel (%p40) target = $region8
    $region5: #{tpu_custom_call.1} parent=1 // loop_body
      %s44 = ssub.s32 %s39, 1
      %s45 = ssub.s32 %s39, 2
      %s46 = sadd.s32 %s39, 1
      %s47 = ssub.s32 %s39, %s46
      %p48 = scmp.eq.s32.totalorder %s47, 0
      %s50 = sadd.s32 %s49, 1
      %s51 = scalar_select %p48, %s49, %s50
      %p54 = pneg %p48
      %p55 = scmp.eq.s32.totalorder %s39, 1
      %p56 = por %p54, %p55
      %p57 = scmp.ne.s32.totalorder %s49, %s52
      %p58 = scmp.eq.s32.totalorder %s39, 0
      %p59 = por %p57, %p58
      %p60 = scmp.ne.s32.totalorder %s49, %s52
      %p61 = scmp.eq.s32.totalorder %s44, 1
      %p62 = por %p60, %p61
      %p63 = scmp.ne.s32.totalorder %s52, %s53
      %p64 = scmp.eq.s32.totalorder %s44, 0
      %p65 = por %p63, %p64
      %p66 = scmp.ne.s32.totalorder %s52, %s53
      %p67 = scmp.eq.s32.totalorder %s45, 1
      %p68 = por %p66, %p67
      %p70 = scmp.ne.s32.totalorder %s53, %s69
      %p71 = scmp.eq.s32.totalorder %s45, 0
      %p72 = por %p70, %p71
      %s73 = ssub.s32 %s39, %s46
      %p74 = scmp.eq.s32.totalorder %s73, 0
      %s76 = sadd.s32 %s75, 1
      %s77 = scalar_select %p74, %s75, %s76
      %p80 = pneg %p74
      %p81 = scmp.eq.s32.totalorder %s39, 1
      %p82 = por %p80, %p81
      %p83 = scmp.ne.s32.totalorder %s75, %s78
      %p84 = scmp.eq.s32.totalorder %s39, 0
      %p85 = por %p83, %p84
      %p86 = scmp.ne.s32.totalorder %s75, %s78
      %p87 = scmp.eq.s32.totalorder %s44, 1
      %p88 = por %p86, %p87
      %p89 = scmp.ne.s32.totalorder %s78, %s79
      %p90 = scmp.eq.s32.totalorder %s44, 0
      %p91 = por %p89, %p90
      %p92 = scmp.ne.s32.totalorder %s78, %s79
      %p93 = scmp.eq.s32.totalorder %s45, 1
      %p94 = por %p92, %p93
      %p96 = scmp.ne.s32.totalorder %s79, %s95
      %p97 = scmp.eq.s32.totalorder %s45, 0
      %p98 = por %p96, %p97
      %s99 = ssub.s32 %s39, %s46
      %p100 = scmp.eq.s32.totalorder %s99, 0
      %s102 = sadd.s32 %s101, 1
      %s103 = scalar_select %p100, %s101, %s102
      %p106 = pneg %p100
      %p107 = scmp.eq.s32.totalorder %s39, 1
      %p108 = por %p106, %p107
      %p109 = scmp.ne.s32.totalorder %s101, %s104
      %p110 = scmp.eq.s32.totalorder %s39, 0
      %p111 = por %p109, %p110
      %p112 = scmp.ne.s32.totalorder %s101, %s104
      %p113 = scmp.eq.s32.totalorder %s44, 1
      %p114 = por %p112, %p113
      %p115 = scmp.ne.s32.totalorder %s104, %s105
      %p116 = scmp.eq.s32.totalorder %s44, 0
      %p117 = por %p115, %p116
      %p118 = scmp.ne.s32.totalorder %s104, %s105
      %p119 = scmp.eq.s32.totalorder %s45, 1
      %p120 = por %p118, %p119
      %p122 = scmp.ne.s32.totalorder %s105, %s121
      %p123 = scmp.eq.s32.totalorder %s45, 0
      %p124 = por %p122, %p123
      %s126 = sadd.s32 %s125, 1
      %p129 = scmp.eq.s32.totalorder %s39, 1
      %p130 = scmp.ne.s32.totalorder %s125, %s127
      %p131 = scmp.eq.s32.totalorder %s39, 0
      %p132 = por %p130, %p131
      %p133 = scmp.ne.s32.totalorder %s125, %s127
      %p134 = scmp.eq.s32.totalorder %s44, 1
      %p135 = por %p133, %p134
      %p136 = scmp.ne.s32.totalorder %s127, %s128
      %p137 = scmp.eq.s32.totalorder %s44, 0
      %p138 = por %p136, %p137
      %p139 = scmp.ne.s32.totalorder %s127, %s128
      %p140 = scmp.eq.s32.totalorder %s45, 1
      %p141 = por %p139, %p140
      %p143 = scmp.ne.s32.totalorder %s128, %s142
      %p144 = scmp.eq.s32.totalorder %s45, 0
      %p145 = por %p143, %p144
      %s147 = sadd.s32 %s146, 1
      %p150 = scmp.eq.s32.totalorder %s39, 1
      %p151 = scmp.ne.s32.totalorder %s146, %s148
      %p152 = scmp.eq.s32.totalorder %s39, 0
      %p153 = por %p151, %p152
      %p154 = scmp.ne.s32.totalorder %s146, %s148
      %p155 = scmp.eq.s32.totalorder %s44, 1
      %p156 = por %p154, %p155
      %p157 = scmp.ne.s32.totalorder %s148, %s149
      %p158 = scmp.eq.s32.totalorder %s44, 0
      %p159 = por %p157, %p158
      %p160 = scmp.ne.s32.totalorder %s148, %s149
      %p161 = scmp.eq.s32.totalorder %s45, 1
      %p162 = por %p160, %p161
      %p164 = scmp.ne.s32.totalorder %s149, %s163
      %p165 = scmp.eq.s32.totalorder %s45, 0
      %p166 = por %p164, %p165
      %s168 = sadd.s32 %s167, 1
      %p171 = scmp.eq.s32.totalorder %s39, 1
      %p172 = scmp.ne.s32.totalorder %s167, %s169
      %p173 = scmp.eq.s32.totalorder %s39, 0
      %p174 = por %p172, %p173
      %p175 = scmp.ne.s32.totalorder %s167, %s169
      %p176 = scmp.eq.s32.totalorder %s44, 1
      %p177 = por %p175, %p176
      %p178 = scmp.ne.s32.totalorder %s169, %s170
      %p179 = scmp.eq.s32.totalorder %s44, 0
      %p180 = por %p178, %p179
      %p181 = scmp.ne.s32.totalorder %s169, %s170
      %p182 = scmp.eq.s32.totalorder %s45, 1
      %p183 = por %p181, %p182
      %p185 = scmp.ne.s32.totalorder %s170, %s184
      %p186 = scmp.eq.s32.totalorder %s45, 0
      %p187 = por %p185, %p186
      %s189 = sadd.s32 %s188, 1
      %p192 = scmp.eq.s32.totalorder %s39, 1
      %p193 = scmp.ne.s32.totalorder %s188, %s190
      %p194 = scmp.eq.s32.totalorder %s39, 0
      %p195 = por %p193, %p194
      %p196 = scmp.ne.s32.totalorder %s188, %s190
      %p197 = scmp.eq.s32.totalorder %s44, 1
      %p198 = por %p196, %p197
      %p199 = scmp.ne.s32.totalorder %s190, %s191
      %p200 = scmp.eq.s32.totalorder %s44, 0
      %p201 = por %p199, %p200
      %p202 = scmp.ne.s32.totalorder %s190, %s191
      %p203 = scmp.eq.s32.totalorder %s45, 1
      %p204 = por %p202, %p203
      %p206 = scmp.ne.s32.totalorder %s191, %s205
      %p207 = scmp.eq.s32.totalorder %s45, 0
      %p208 = por %p206, %p207
      %s210 = sadd.s32 %s209, 1
      %p213 = scmp.eq.s32.totalorder %s39, 1
      %p214 = scmp.ne.s32.totalorder %s209, %s211
      %p215 = scmp.eq.s32.totalorder %s39, 0
      %p216 = por %p214, %p215
      %p217 = scmp.ne.s32.totalorder %s209, %s211
      %p218 = scmp.eq.s32.totalorder %s44, 1
      %p219 = por %p217, %p218
      %p220 = scmp.ne.s32.totalorder %s211, %s212
      %p221 = scmp.eq.s32.totalorder %s44, 0
      %p222 = por %p220, %p221
      %p223 = scmp.ne.s32.totalorder %s211, %s212
      %p224 = scmp.eq.s32.totalorder %s45, 1
      %p225 = por %p223, %p224
      %p227 = scmp.ne.s32.totalorder %s212, %s226
      %p228 = scmp.eq.s32.totalorder %s45, 0
      %p229 = por %p227, %p228
      %s231 = sadd.s32 %s230, 1
      %p234 = scmp.eq.s32.totalorder %s39, 1
      %p235 = scmp.ne.s32.totalorder %s230, %s232
      %p236 = scmp.eq.s32.totalorder %s39, 0
      %p237 = por %p235, %p236
      %p238 = scmp.ne.s32.totalorder %s230, %s232
      %p239 = scmp.eq.s32.totalorder %s44, 1
      %p240 = por %p238, %p239
      %p241 = scmp.ne.s32.totalorder %s232, %s233
      %p242 = scmp.eq.s32.totalorder %s44, 0
      %p243 = por %p241, %p242
      %p244 = scmp.ne.s32.totalorder %s232, %s233
      %p245 = scmp.eq.s32.totalorder %s45, 1
      %p246 = por %p244, %p245
      %p248 = scmp.ne.s32.totalorder %s233, %s247
      %p249 = scmp.eq.s32.totalorder %s45, 0
      %p250 = por %p248, %p249
      %s252 = sadd.s32 %s251, 1
      %p255 = scmp.eq.s32.totalorder %s39, 1
      %p256 = scmp.ne.s32.totalorder %s251, %s253
      %p257 = scmp.eq.s32.totalorder %s39, 0
      %p258 = por %p256, %p257
      %p259 = scmp.ne.s32.totalorder %s251, %s253
      %p260 = scmp.eq.s32.totalorder %s44, 1
      %p261 = por %p259, %p260
      %p262 = scmp.ne.s32.totalorder %s253, %s254
      %p263 = scmp.eq.s32.totalorder %s44, 0
      %p264 = por %p262, %p263
      %p265 = scmp.ne.s32.totalorder %s253, %s254
      %p266 = scmp.eq.s32.totalorder %s45, 1
      %p267 = por %p265, %p266
      %p269 = scmp.ne.s32.totalorder %s254, %s268
      %p270 = scmp.eq.s32.totalorder %s45, 0
      %p271 = por %p269, %p270
      %s273 = sadd.s32 %s272, 1
      %p276 = scmp.eq.s32.totalorder %s39, 1
      %p277 = scmp.ne.s32.totalorder %s272, %s274
      %p278 = scmp.eq.s32.totalorder %s39, 0
      %p279 = por %p277, %p278
      %p280 = scmp.ne.s32.totalorder %s272, %s274
      %p281 = scmp.eq.s32.totalorder %s44, 1
      %p282 = por %p280, %p281
      %p283 = scmp.ne.s32.totalorder %s274, %s275
      %p284 = scmp.eq.s32.totalorder %s44, 0
      %p285 = por %p283, %p284
      %p286 = scmp.ne.s32.totalorder %s274, %s275
      %p287 = scmp.eq.s32.totalorder %s45, 1
      %p288 = por %p286, %p287
      %p290 = scmp.ne.s32.totalorder %s275, %s289
      %p291 = scmp.eq.s32.totalorder %s45, 0
      %p292 = por %p290, %p291
      %s294 = sadd.s32 %s293, 1
      %p297 = scmp.eq.s32.totalorder %s39, 1
      %p298 = scmp.ne.s32.totalorder %s293, %s295
      %p299 = scmp.eq.s32.totalorder %s39, 0
      %p300 = por %p298, %p299
      %p301 = scmp.ne.s32.totalorder %s293, %s295
      %p302 = scmp.eq.s32.totalorder %s44, 1
      %p303 = por %p301, %p302
      %p304 = scmp.ne.s32.totalorder %s295, %s296
      %p305 = scmp.eq.s32.totalorder %s44, 0
      %p306 = por %p304, %p305
      %p307 = scmp.ne.s32.totalorder %s295, %s296
      %p308 = scmp.eq.s32.totalorder %s45, 1
      %p309 = por %p307, %p308
      %p311 = scmp.ne.s32.totalorder %s296, %s310
      %p312 = scmp.eq.s32.totalorder %s45, 0
      %p313 = por %p311, %p312
      %s315 = sadd.s32 %s314, 1
      %p318 = scmp.eq.s32.totalorder %s39, 1
      %p319 = scmp.ne.s32.totalorder %s314, %s316
      %p320 = scmp.eq.s32.totalorder %s39, 0
      %p321 = por %p319, %p320
      %p322 = scmp.ne.s32.totalorder %s314, %s316
      %p323 = scmp.eq.s32.totalorder %s44, 1
      %p324 = por %p322, %p323
      %p325 = scmp.ne.s32.totalorder %s316, %s317
      %p326 = scmp.eq.s32.totalorder %s44, 0
      %p327 = por %p325, %p326
      %p328 = scmp.ne.s32.totalorder %s316, %s317
      %p329 = scmp.eq.s32.totalorder %s45, 1
      %p330 = por %p328, %p329
      %p332 = scmp.ne.s32.totalorder %s317, %s331
      %p333 = scmp.eq.s32.totalorder %s45, 0
      %p334 = por %p332, %p333
      %s336 = sadd.s32 %s335, 1
      %p339 = scmp.eq.s32.totalorder %s39, 1
      %p340 = scmp.ne.s32.totalorder %s335, %s337
      %p341 = scmp.eq.s32.totalorder %s39, 0
      %p342 = por %p340, %p341
      %p343 = scmp.ne.s32.totalorder %s335, %s337
      %p344 = scmp.eq.s32.totalorder %s44, 1
      %p345 = por %p343, %p344
      %p346 = scmp.ne.s32.totalorder %s337, %s338
      %p347 = scmp.eq.s32.totalorder %s44, 0
      %p348 = por %p346, %p347
      %p349 = scmp.ne.s32.totalorder %s337, %s338
      %p350 = scmp.eq.s32.totalorder %s45, 1
      %p351 = por %p349, %p350
      %p353 = scmp.ne.s32.totalorder %s338, %s352
      %p354 = scmp.eq.s32.totalorder %s45, 0
      %p355 = por %p353, %p354
      %s357 = sadd.s32 %s356, 1
      %p360 = scmp.eq.s32.totalorder %s39, 1
      %p361 = scmp.ne.s32.totalorder %s356, %s358
      %p362 = scmp.eq.s32.totalorder %s39, 0
      %p363 = por %p361, %p362
      %p364 = scmp.ne.s32.totalorder %s356, %s358
      %p365 = scmp.eq.s32.totalorder %s44, 1
      %p366 = por %p364, %p365
      %p367 = scmp.ne.s32.totalorder %s358, %s359
      %p368 = scmp.eq.s32.totalorder %s44, 0
      %p369 = por %p367, %p368
      %p370 = scmp.ne.s32.totalorder %s358, %s359
      %p371 = scmp.eq.s32.totalorder %s45, 1
      %p372 = por %p370, %p371
      %p374 = scmp.ne.s32.totalorder %s359, %s373
      %p375 = scmp.eq.s32.totalorder %s45, 0
      %p376 = por %p374, %p375
      %s378 = sadd.s32 %s377, 1
      %p381 = scmp.eq.s32.totalorder %s39, 1
      %p382 = scmp.ne.s32.totalorder %s377, %s379
      %p383 = scmp.eq.s32.totalorder %s39, 0
      %p384 = por %p382, %p383
      %p385 = scmp.ne.s32.totalorder %s377, %s379
      %p386 = scmp.eq.s32.totalorder %s44, 1
      %p387 = por %p385, %p386
      %p388 = scmp.ne.s32.totalorder %s379, %s380
      %p389 = scmp.eq.s32.totalorder %s44, 0
      %p390 = por %p388, %p389
      %p391 = scmp.ne.s32.totalorder %s379, %s380
      %p392 = scmp.eq.s32.totalorder %s45, 1
      %p393 = por %p391, %p392
      %p395 = scmp.ne.s32.totalorder %s380, %s394
      %p396 = scmp.eq.s32.totalorder %s45, 0
      %p397 = por %p395, %p396
      %s399 = sadd.s32 %s398, 1
      %p402 = scmp.eq.s32.totalorder %s39, 1
      %p403 = scmp.ne.s32.totalorder %s398, %s400
      %p404 = scmp.eq.s32.totalorder %s39, 0
      %p405 = por %p403, %p404
      %p406 = scmp.ne.s32.totalorder %s398, %s400
      %p407 = scmp.eq.s32.totalorder %s44, 1
      %p408 = por %p406, %p407
      %p409 = scmp.ne.s32.totalorder %s400, %s401
      %p410 = scmp.eq.s32.totalorder %s44, 0
      %p411 = por %p409, %p410
      %p412 = scmp.ne.s32.totalorder %s400, %s401
      %p413 = scmp.eq.s32.totalorder %s45, 1
      %p414 = por %p412, %p413
      %p416 = scmp.ne.s32.totalorder %s401, %s415
      %p417 = scmp.eq.s32.totalorder %s45, 0
      %p418 = por %p416, %p417
      %s420 = sadd.s32 %s419, 1
      %p423 = scmp.eq.s32.totalorder %s39, 1
      %p424 = scmp.ne.s32.totalorder %s419, %s421
      %p425 = scmp.eq.s32.totalorder %s39, 0
      %p426 = por %p424, %p425
      %p427 = scmp.ne.s32.totalorder %s419, %s421
      %p428 = scmp.eq.s32.totalorder %s44, 1
      %p429 = por %p427, %p428
      %p430 = scmp.ne.s32.totalorder %s421, %s422
      %p431 = scmp.eq.s32.totalorder %s44, 0
      %p432 = por %p430, %p431
      %p433 = scmp.ne.s32.totalorder %s421, %s422
      %p434 = scmp.eq.s32.totalorder %s45, 1
      %p435 = por %p433, %p434
      %p437 = scmp.ne.s32.totalorder %s422, %s436
      %p438 = scmp.eq.s32.totalorder %s45, 0
      %p439 = por %p437, %p438
      %s440 = ssub.s32 %s39, %s46
      %p441 = scmp.eq.s32.totalorder %s440, 0
      %s443 = sadd.s32 %s442, 1
      %s444 = scalar_select %p441, %s442, %s443
      %p447 = pneg %p441
      %p448 = scmp.eq.s32.totalorder %s39, 1
      %p449 = por %p447, %p448
      %p450 = scmp.ne.s32.totalorder %s442, %s445
      %p451 = scmp.eq.s32.totalorder %s39, 0
      %p452 = por %p450, %p451
      %p453 = scmp.ne.s32.totalorder %s442, %s445
      %p454 = scmp.eq.s32.totalorder %s44, 1
      %p455 = por %p453, %p454
      %p456 = scmp.ne.s32.totalorder %s445, %s446
      %p457 = scmp.eq.s32.totalorder %s44, 0
      %p458 = por %p456, %p457
      %p459 = scmp.ne.s32.totalorder %s445, %s446
      %p460 = scmp.eq.s32.totalorder %s45, 1
      %p461 = por %p459, %p460
      %p463 = scmp.ne.s32.totalorder %s446, %s462
      %p464 = scmp.eq.s32.totalorder %s45, 0
      %p465 = por %p463, %p464
      %p466 = scmp.le.s32.totalorder 1, %s39
      %p467 = scmp.lt.s32.totalorder %s39, 3
      %p468 = pnand %p466, %p467
      %p469 = pneg %p468
      // Predicated region
      $region9: #{tpu_custom_call.1} parent=5 // pred_check
        _
      $region10: #{tpu_custom_call.1} parent=5 // pred_check_branch
        %471 = sbr.rel (%p468) target = $region12
      $region11: #{tpu_custom_call.1} parent=5 // pred_region
        %s472 = ssub.s32 %s39, 1
        // Predicated region
        $region13: #{tpu_custom_call.1} parent=11 // pred_check
          %p473 = pneg %p138
        $region14: #{tpu_custom_call.1} parent=11 // pred_check_branch
          %475 = sbr.rel (%p473) target = $region16
        $region15: #{tpu_custom_call.1} parent=11 // pred_region
          %s477 = ssub.s32 128, 128
          %478 = vsyncadd [#allocation9], %s477
          %s480 = sshll.u32 [#allocation8], 4
          %s481 = int_to_ptr.vmem [resolvable:$true] %s480
          %483 = dma.hbm_to_vmem [thread:$0]  %s3, 128, %s481, [#allocation9]
        $region16: #{tpu_custom_call.1} parent=11 // pred_fallthru
          _
        // Predicated region
        $region17: #{tpu_custom_call.1} parent=11 // pred_check
          %p484 = pneg %p159
        $region18: #{tpu_custom_call.1} parent=11 // pred_check_branch
          %486 = sbr.rel (%p484) target = $region20
        $region19: #{tpu_custom_call.1} parent=11 // pred_region
          %s488 = ssub.s32 128, 128
          %489 = vsyncadd [#allocation9], %s488
          %s491 = sshll.u32 [#allocation10], 4
          %s492 = int_to_ptr.vmem [resolvable:$true] %s491
          %494 = dma.hbm_to_vmem [thread:$0]  %s4, 128, %s492, [#allocation9]
        $region20: #{tpu_custom_call.1} parent=11 // pred_fallthru
          _
        // Predicated region
        $region21: #{tpu_custom_call.1} parent=11 // pred_check
          %p495 = pneg %p180
        $region22: #{tpu_custom_call.1} parent=11 // pred_check_branch
          %497 = sbr.rel (%p495) target = $region24
        $region23: #{tpu_custom_call.1} parent=11 // pred_region
          _
        $region24: #{tpu_custom_call.1} parent=11 // pred_fallthru
          _
        // Predicated region
        $region25: #{tpu_custom_call.1} parent=11 // pred_check
          %p498 = pneg %p201
        $region26: #{tpu_custom_call.1} parent=11 // pred_check_branch
          %500 = sbr.rel (%p498) target = $region28
        $region27: #{tpu_custom_call.1} parent=11 // pred_region
          %s502 = ssub.s32 2048, 2048
          %503 = vsyncadd [#allocation12], %s502
          %s504 = sshll.u32 [#allocation11], 4
          %s505 = int_to_ptr.vmem [resolvable:$true] %s504
          %510 = dma.hbm_to_vmem [thread:$0]  %s6, 2048, %s505, [#allocation12], 64, 64, 4
        $region28: #{tpu_custom_call.1} parent=11 // pred_fallthru
          _
        // Predicated region
        $region29: #{tpu_custom_call.1} parent=11 // pred_check
          %p511 = pneg %p222
        $region30: #{tpu_custom_call.1} parent=11 // pred_check_branch
          %513 = sbr.rel (%p511) target = $region32
        $region31: #{tpu_custom_call.1} parent=11 // pred_region
          %s515 = ssub.s32 3072, 3072
          %516 = vsyncadd [#allocation12], %s515
          %s517 = sshll.u32 [#allocation13], 4
          %s518 = int_to_ptr.vmem [resolvable:$true] %s517
          %523 = dma.hbm_to_vmem [thread:$0]  %s7, 3072, %s518, [#allocation12], 192, 192, 12
        $region32: #{tpu_custom_call.1} parent=11 // pred_fallthru
          _
        // Predicated region
        $region33: #{tpu_custom_call.1} parent=11 // pred_check
          %p524 = pneg %p243
        $region34: #{tpu_custom_call.1} parent=11 // pred_check_branch
          %526 = sbr.rel (%p524) target = $region36
        $region35: #{tpu_custom_call.1} parent=11 // pred_region
          %s528 = ssub.s32 48, 48
          %529 = vsyncadd [#allocation15], %s528
          %s531 = sshll.u32 [#allocation14], 4
          %s532 = int_to_ptr.vmem [resolvable:$true] %s531
          %534 = dma.hbm_to_vmem [thread:$0]  %s8, 48, %s532, [#allocation15]
        $region36: #{tpu_custom_call.1} parent=11 // pred_fallthru
          _
        // Predicated region
        $region37: #{tpu_custom_call.1} parent=11 // pred_check
          %p535 = pneg %p264
        $region38: #{tpu_custom_call.1} parent=11 // pred_check_branch
          %537 = sbr.rel (%p535) target = $region40
        $region39: #{tpu_custom_call.1} parent=11 // pred_region
          %s539 = ssub.s32 2048, 2048
          %540 = vsyncadd [#allocation15], %s539
          %s541 = sshll.u32 [#allocation16], 4
          %s542 = int_to_ptr.vmem [resolvable:$true] %s541
          %547 = dma.hbm_to_vmem [thread:$0]  %s9, 2048, %s542, [#allocation15], 128, 128, 8
        $region40: #{tpu_custom_call.1} parent=11 // pred_fallthru
          _
        // Predicated region
        $region41: #{tpu_custom_call.1} parent=11 // pred_check
          %p548 = pneg %p285
        $region42: #{tpu_custom_call.1} parent=11 // pred_check_branch
          %550 = sbr.rel (%p548) target = $region44
        $region43: #{tpu_custom_call.1} parent=11 // pred_region
          %s552 = ssub.s32 32, 32
          %553 = vsyncadd [#allocation18], %s552
          %s555 = sshll.u32 [#allocation17], 4
          %s556 = int_to_ptr.vmem [resolvable:$true] %s555
          %558 = dma.hbm_to_vmem [thread:$0]  %s10, 32, %s556, [#allocation18]
        $region44: #{tpu_custom_call.1} parent=11 // pred_fallthru
          _
        // Predicated region
        $region45: #{tpu_custom_call.1} parent=11 // pred_check
          %p559 = pneg %p306
        $region46: #{tpu_custom_call.1} parent=11 // pred_check_branch
          %561 = sbr.rel (%p559) target = $region48
        $region47: #{tpu_custom_call.1} parent=11 // pred_region
          %s563 = ssub.s32 1024, 1024
          %564 = vsyncadd [#allocation18], %s563
          %s565 = sshll.u32 [#allocation19], 4
          %s566 = int_to_ptr.vmem [resolvable:$true] %s565
          %571 = dma.hbm_to_vmem [thread:$0]  %s11, 1024, %s566, [#allocation18], 64, 64, 4
        $region48: #{tpu_custom_call.1} parent=11 // pred_fallthru
          _
        // Predicated region
        $region49: #{tpu_custom_call.1} parent=11 // pred_check
          %p572 = pneg %p327
        $region50: #{tpu_custom_call.1} parent=11 // pred_check_branch
          %574 = sbr.rel (%p572) target = $region52
        $region51: #{tpu_custom_call.1} parent=11 // pred_region
          %s576 = ssub.s32 4096, 4096
          %577 = vsyncadd [#allocation21], %s576
          %s578 = sshll.u32 [#allocation20], 4
          %s579 = int_to_ptr.vmem [resolvable:$true] %s578
          %584 = dma.hbm_to_vmem [thread:$0]  %s12, 4096, %s579, [#allocation21], 256, 256, 16
        $region52: #{tpu_custom_call.1} parent=11 // pred_fallthru
          _
        // Predicated region
        $region53: #{tpu_custom_call.1} parent=11 // pred_check
          %p585 = pneg %p348
        $region54: #{tpu_custom_call.1} parent=11 // pred_check_branch
          %587 = sbr.rel (%p585) target = $region56
        $region55: #{tpu_custom_call.1} parent=11 // pred_region
          _
        $region56: #{tpu_custom_call.1} parent=11 // pred_fallthru
          _
        // Predicated region
        $region57: #{tpu_custom_call.1} parent=11 // pred_check
          %p588 = pneg %p369
        $region58: #{tpu_custom_call.1} parent=11 // pred_check_branch
          %590 = sbr.rel (%p588) target = $region60
        $region59: #{tpu_custom_call.1} parent=11 // pred_region
          %s592 = ssub.s32 4096, 4096
          %593 = vsyncadd [#allocation21], %s592
          %s594 = sshll.u32 [#allocation22], 4
          %s595 = int_to_ptr.vmem [resolvable:$true] %s594
          %600 = dma.hbm_to_vmem [thread:$0]  %s14, 4096, %s595, [#allocation21], 64, 64, 4
        $region60: #{tpu_custom_call.1} parent=11 // pred_fallthru
          _
        // Predicated region
        $region61: #{tpu_custom_call.1} parent=11 // pred_check
          %p601 = pneg %p390
        $region62: #{tpu_custom_call.1} parent=11 // pred_check_branch
          %603 = sbr.rel (%p601) target = $region64
        $region63: #{tpu_custom_call.1} parent=11 // pred_region
          %s605 = ssub.s32 2048, 2048
          %606 = vsyncadd [#allocation24], %s605
          %s607 = sshll.u32 [#allocation23], 4
          %s608 = int_to_ptr.vmem [resolvable:$true] %s607
          %613 = dma.hbm_to_vmem [thread:$0]  %s15, 2048, %s608, [#allocation24], 128, 128, 8
        $region64: #{tpu_custom_call.1} parent=11 // pred_fallthru
          _
        // Predicated region
        $region65: #{tpu_custom_call.1} parent=11 // pred_check
          %p614 = pneg %p411
        $region66: #{tpu_custom_call.1} parent=11 // pred_check_branch
          %616 = sbr.rel (%p614) target = $region68
        $region67: #{tpu_custom_call.1} parent=11 // pred_region
          _
        $region68: #{tpu_custom_call.1} parent=11 // pred_fallthru
          _
        // Predicated region
        $region69: #{tpu_custom_call.1} parent=11 // pred_check
          %p617 = pneg %p432
        $region70: #{tpu_custom_call.1} parent=11 // pred_check_branch
          %619 = sbr.rel (%p617) target = $region72
        $region71: #{tpu_custom_call.1} parent=11 // pred_region
          _
        $region72: #{tpu_custom_call.1} parent=11 // pred_fallthru
          _
      $region12: #{tpu_custom_call.1} parent=5 // pred_fallthru
        _
      %p620 = scmp.lt.s32.totalorder %s39, 2
      // Predicated region
      $region73: #{tpu_custom_call.1} parent=5 // pred_check
        %p621 = pneg %p620
      $region74: #{tpu_custom_call.1} parent=5 // pred_check_branch
        %623 = sbr.rel (%p621) target = $region76
      $region75: #{tpu_custom_call.1} parent=5 // pred_region
        // Predicated region
        $region77: #{tpu_custom_call.1} parent=75 // pred_check
          %p624 = pneg %p59
        $region78: #{tpu_custom_call.1} parent=75 // pred_check_branch
          %626 = sbr.rel (%p624) target = $region80
        $region79: #{tpu_custom_call.1} parent=75 // pred_region
          %s627 = sand.u32 %s49, 1
          %s628 = scalar_lea.sflag [#allocation3], %s627
          %s629 = sand.u32 %s49, 1
          %s630 = smul.addr %s629, 8
          %s631 = scalar_lea.vmem [#allocation2], %s630
          %s633 = ssub.s32 128, 128
          %634 = vsyncadd %s628, %s633
          %s635 = smul.addr %s39, 2
          %s636 = smul.addr %s635, 64
          %s637 = scalar_lea.hbm %s0, %s636
          %s639 = sshll.u32 %s631, 4
          %s640 = int_to_ptr.vmem [resolvable:$true] %s639
          %642 = dma.hbm_to_vmem [thread:$0]  %s637, 128, %s640, %s628
        $region80: #{tpu_custom_call.1} parent=75 // pred_fallthru
          _
        // Predicated region
        $region81: #{tpu_custom_call.1} parent=75 // pred_check
          %p643 = pneg %p85
        $region82: #{tpu_custom_call.1} parent=75 // pred_check_branch
          %645 = sbr.rel (%p643) target = $region84
        $region83: #{tpu_custom_call.1} parent=75 // pred_region
          %s646 = sand.u32 %s39, 1
          %s647 = scalar_lea.sflag [#allocation6], %s646
          %s648 = sand.u32 %s75, 1
          %s649 = smul.addr %s648, 4
          %s650 = scalar_lea.vmem [#allocation5], %s649
          %s652 = ssub.s32 64, 64
          %653 = vsyncadd %s647, %s652
          %s654 = smul.addr %s39, 64
          %s655 = scalar_lea.hbm %s1, %s654
          %s657 = sshll.u32 %s650, 4
          %s658 = int_to_ptr.vmem [resolvable:$true] %s657
          %660 = dma.hbm_to_vmem [thread:$0]  %s655, 64, %s658, %s647
        $region84: #{tpu_custom_call.1} parent=75 // pred_fallthru
          _
        // Predicated region
        $region85: #{tpu_custom_call.1} parent=75 // pred_check
          %p661 = pneg %p111
        $region86: #{tpu_custom_call.1} parent=75 // pred_check_branch
          %663 = sbr.rel (%p661) target = $region88
        $region87: #{tpu_custom_call.1} parent=75 // pred_region
          %s664 = sand.u32 %s39, 1
          %s665 = scalar_lea.sflag [#allocation6], %s664
          %s666 = sand.u32 %s101, 1
          %s667 = scalar_lea.vmem [#allocation7], %s666
          %s669 = ssub.s32 16, 16
          %670 = vsyncadd %s665, %s669
          %s671 = smul.addr %s39, 16
          %s672 = scalar_lea.hbm %s2, %s671
          %s674 = sshll.u32 %s667, 4
          %s675 = int_to_ptr.vmem [resolvable:$true] %s674
          %677 = dma.hbm_to_vmem [thread:$0]  %s672, 16, %s675, %s665
        $region88: #{tpu_custom_call.1} parent=75 // pred_fallthru
          _
      $region76: #{tpu_custom_call.1} parent=5 // pred_fallthru
        _
      %p678 = scmp.le.s32.totalorder 1, %s39
      %p679 = scmp.lt.s32.totalorder %s39, 3
      %p680 = pnand %p678, %p679
      %p681 = pneg %p680
      // Predicated region
      $region89: #{tpu_custom_call.1} parent=5 // pred_check
        _
      $region90: #{tpu_custom_call.1} parent=5 // pred_check_branch
        %683 = sbr.rel (%p680) target = $region92
      $region91: #{tpu_custom_call.1} parent=5 // pred_region
        %s684 = ssub.s32 %s39, 1
        %s685 = sand.u32 %s52, 1
        %s686 = scalar_lea.sflag [#allocation3], %s685
        %s687 = sand.u32 %s52, 1
        %s688 = smul.addr %s687, 8
        %s689 = scalar_lea.vmem [#allocation2], %s688
        // Predicated region
        $region93: #{tpu_custom_call.1} parent=91 // pred_check
          %p690 = pneg %p65
        $region94: #{tpu_custom_call.1} parent=91 // pred_check_branch
          %692 = sbr.rel (%p690) target = $region96
        $region95: #{tpu_custom_call.1} parent=91 // pred_region
          %693 = dma.done %s686, 128
        $region96: #{tpu_custom_call.1} parent=91 // pred_fallthru
          _
        %s694 = sand.u32 %s44, 1
        %s695 = scalar_lea.sflag [#allocation6], %s694
        %s696 = sand.u32 %s78, 1
        %s697 = smul.addr %s696, 4
        %s698 = scalar_lea.vmem [#allocation5], %s697
        // Predicated region
        $region97: #{tpu_custom_call.1} parent=91 // pred_check
          %p699 = pneg %p91
        $region98: #{tpu_custom_call.1} parent=91 // pred_check_branch
          %701 = sbr.rel (%p699) target = $region100
        $region99: #{tpu_custom_call.1} parent=91 // pred_region
          %702 = dma.done %s695, 64
        $region100: #{tpu_custom_call.1} parent=91 // pred_fallthru
          _
        %s703 = sand.u32 %s44, 1
        %s704 = scalar_lea.sflag [#allocation6], %s703
        %s705 = sand.u32 %s104, 1
        %s706 = scalar_lea.vmem [#allocation7], %s705
        // Predicated region
        $region101: #{tpu_custom_call.1} parent=91 // pred_check
          %p707 = pneg %p117
        $region102: #{tpu_custom_call.1} parent=91 // pred_check_branch
          %709 = sbr.rel (%p707) target = $region104
        $region103: #{tpu_custom_call.1} parent=91 // pred_region
          %710 = dma.done %s704, 16
        $region104: #{tpu_custom_call.1} parent=91 // pred_fallthru
          _
        // Predicated region
        $region105: #{tpu_custom_call.1} parent=91 // pred_check
          %p711 = pneg %p138
        $region106: #{tpu_custom_call.1} parent=91 // pred_check_branch
          %713 = sbr.rel (%p711) target = $region108
        $region107: #{tpu_custom_call.1} parent=91 // pred_region
          %714 = dma.done [#allocation9], 128
        $region108: #{tpu_custom_call.1} parent=91 // pred_fallthru
          _
        // Predicated region
        $region109: #{tpu_custom_call.1} parent=91 // pred_check
          %p715 = pneg %p159
        $region110: #{tpu_custom_call.1} parent=91 // pred_check_branch
          %717 = sbr.rel (%p715) target = $region112
        $region111: #{tpu_custom_call.1} parent=91 // pred_region
          %718 = dma.done [#allocation9], 128
        $region112: #{tpu_custom_call.1} parent=91 // pred_fallthru
          _
        // Predicated region
        $region113: #{tpu_custom_call.1} parent=91 // pred_check
          %p719 = pneg %p201
        $region114: #{tpu_custom_call.1} parent=91 // pred_check_branch
          %721 = sbr.rel (%p719) target = $region116
        $region115: #{tpu_custom_call.1} parent=91 // pred_region
          %722 = dma.done [#allocation12], 2048
        $region116: #{tpu_custom_call.1} parent=91 // pred_fallthru
          _
        // Predicated region
        $region117: #{tpu_custom_call.1} parent=91 // pred_check
          %p723 = pneg %p222
        $region118: #{tpu_custom_call.1} parent=91 // pred_check_branch
          %725 = sbr.rel (%p723) target = $region120
        $region119: #{tpu_custom_call.1} parent=91 // pred_region
          %726 = dma.done [#allocation12], 3072
        $region120: #{tpu_custom_call.1} parent=91 // pred_fallthru
          _
        // Predicated region
        $region121: #{tpu_custom_call.1} parent=91 // pred_check
          %p727 = pneg %p243
        $region122: #{tpu_custom_call.1} parent=91 // pred_check_branch
          %729 = sbr.rel (%p727) target = $region124
        $region123: #{tpu_custom_call.1} parent=91 // pred_region
          %730 = dma.done [#allocation15], 48
        $region124: #{tpu_custom_call.1} parent=91 // pred_fallthru
          _
        // Predicated region
        $region125: #{tpu_custom_call.1} parent=91 // pred_check
          %p731 = pneg %p264
        $region126: #{tpu_custom_call.1} parent=91 // pred_check_branch
          %733 = sbr.rel (%p731) target = $region128
        $region127: #{tpu_custom_call.1} parent=91 // pred_region
          %734 = dma.done [#allocation15], 2048
        $region128: #{tpu_custom_call.1} parent=91 // pred_fallthru
          _
        // Predicated region
        $region129: #{tpu_custom_call.1} parent=91 // pred_check
          %p735 = pneg %p285
        $region130: #{tpu_custom_call.1} parent=91 // pred_check_branch
          %737 = sbr.rel (%p735) target = $region132
        $region131: #{tpu_custom_call.1} parent=91 // pred_region
          %738 = dma.done [#allocation18], 32
        $region132: #{tpu_custom_call.1} parent=91 // pred_fallthru
          _
        // Predicated region
        $region133: #{tpu_custom_call.1} parent=91 // pred_check
          %p739 = pneg %p306
        $region134: #{tpu_custom_call.1} parent=91 // pred_check_branch
          %741 = sbr.rel (%p739) target = $region136
        $region135: #{tpu_custom_call.1} parent=91 // pred_region
          %742 = dma.done [#allocation18], 1024
        $region136: #{tpu_custom_call.1} parent=91 // pred_fallthru
          _
        // Predicated region
        $region137: #{tpu_custom_call.1} parent=91 // pred_check
          %p743 = pneg %p327
        $region138: #{tpu_custom_call.1} parent=91 // pred_check_branch
          %745 = sbr.rel (%p743) target = $region140
        $region139: #{tpu_custom_call.1} parent=91 // pred_region
          %746 = dma.done [#allocation21], 4096
        $region140: #{tpu_custom_call.1} parent=91 // pred_fallthru
          _
        // Predicated region
        $region141: #{tpu_custom_call.1} parent=91 // pred_check
          %p747 = pneg %p369
        $region142: #{tpu_custom_call.1} parent=91 // pred_check_branch
          %749 = sbr.rel (%p747) target = $region144
        $region143: #{tpu_custom_call.1} parent=91 // pred_region
          %750 = dma.done [#allocation21], 4096
        $region144: #{tpu_custom_call.1} parent=91 // pred_fallthru
          _
        // Predicated region
        $region145: #{tpu_custom_call.1} parent=91 // pred_check
          %p751 = pneg %p390
        $region146: #{tpu_custom_call.1} parent=91 // pred_check_branch
          %753 = sbr.rel (%p751) target = $region148
        $region147: #{tpu_custom_call.1} parent=91 // pred_region
          %754 = dma.done [#allocation24], 2048
        $region148: #{tpu_custom_call.1} parent=91 // pred_fallthru
          _
        %s755 = sand.u32 %s52, 1
        %s756 = scalar_lea.sflag [#allocation3], %s755
        %s757 = sand.u32 %s52, 1
        %s758 = smul.addr %s757, 8
        %s759 = scalar_lea.vmem [#allocation2], %s758
        %p760 = pneg %p65
        %p761 = pneg %p62
        %s762 = sand.u32 %s44, 1
        %s763 = scalar_lea.sflag [#allocation6], %s762
        %s764 = sand.u32 %s78, 1
        %s765 = smul.addr %s764, 4
        %s766 = scalar_lea.vmem [#allocation5], %s765
        %p767 = pneg %p91
        %p768 = pneg %p88
        %s769 = sand.u32 %s44, 1
        %s770 = scalar_lea.sflag [#allocation6], %s769
        %s771 = sand.u32 %s104, 1
        %s772 = scalar_lea.vmem [#allocation7], %s771
        %p773 = pneg %p117
        %p774 = pneg %p114
        %p775 = pneg %p138
        %p776 = pneg %p135
        %p777 = pneg %p159
        %p778 = pneg %p156
        %p779 = pneg %p180
        %p780 = pneg %p177
        %p781 = pneg %p201
        %p782 = pneg %p198
        %p783 = pneg %p222
        %p784 = pneg %p219
        %p785 = pneg %p243
        %p786 = pneg %p240
        %p787 = pneg %p264
        %p788 = pneg %p261
        %p789 = pneg %p285
        %p790 = pneg %p282
        %p791 = pneg %p306
        %p792 = pneg %p303
        %p793 = pneg %p327
        %p794 = pneg %p324
        %p795 = pneg %p348
        %p796 = pneg %p345
        %p797 = pneg %p369
        %p798 = pneg %p366
        %p799 = pneg %p390
        %p800 = pneg %p387
        %p801 = pneg %p411
        %p802 = pneg %p408
        %p803 = pneg %p432
        %p804 = pneg %p429
        %p805 = pneg %p458
        %p806 = pneg %p455
        %s807 = sand.u32 %s445, 1
        %s808 = scalar_lea.sflag [#allocation4], %s807
        %s809 = sand.u32 %s445, 1
        %s810 = smul.addr %s809, 16
        %s811 = scalar_lea.vmem [#allocation25], %s810
        %v813 = vld [vmem:[%s17] sm:$0x1]
        %v814 = vld [vmem:[%s17 + $0x1] sm:$0x1]
        %v815 = vld [vmem:[%s17 + $0x2] sm:$0x1]
        %v816 = vld [vmem:[%s17 + $0x3] sm:$0x1]
        %v817 = vld [vmem:[%s17 + $0x4] sm:$0x1]
        %v818 = vld [vmem:[%s17 + $0x5] sm:$0x1]
        %v819 = vld [vmem:[%s17 + $0x6] sm:$0x1]
        %v820 = vld [vmem:[%s689] sm:$0xff]
        %v821 = vld [vmem:[#allocation11] sm:$0xf]
        %v822 = vld [vmem:[#allocation11 + $0x4] sm:$0xf]
        %v823 = vld [vmem:[#allocation11 + $0x8] sm:$0xf]
        %v824 = vld [vmem:[#allocation11 + $0xc] sm:$0xf]
        %v825 = vld [vmem:[#allocation11 + $0x10] sm:$0xf]
        %v826 = vld [vmem:[#allocation11 + $0x14] sm:$0xf]
        %v827 = vld [vmem:[#allocation11 + $0x18] sm:$0xf]
        %v828 = vld [vmem:[#allocation11 + $0x1c] sm:$0xf]
        %v829 = vld [vmem:[#allocation11 + $0x20] sm:$0xf]
        %v830 = vld [vmem:[#allocation11 + $0x24] sm:$0xf]
        %v831 = vld [vmem:[#allocation11 + $0x28] sm:$0xf]
        %v832 = vld [vmem:[#allocation11 + $0x2c] sm:$0xf]
        %v833 = vld [vmem:[#allocation11 + $0x30] sm:$0xf]
        %v834 = vld [vmem:[#allocation11 + $0x34] sm:$0xf]
        %v835 = vld [vmem:[#allocation11 + $0x38] sm:$0xf]
        %v836 = vld [vmem:[#allocation11 + $0x3c] sm:$0xf]
        %v837 = vld [vmem:[#allocation11 + $0x40] sm:$0xf]
        %v838 = vld [vmem:[#allocation11 + $0x44] sm:$0xf]
        %v839 = vld [vmem:[#allocation11 + $0x48] sm:$0xf]
        %v840 = vld [vmem:[#allocation11 + $0x4c] sm:$0xf]
        %v841 = vld [vmem:[#allocation11 + $0x50] sm:$0xf]
        %v842 = vld [vmem:[#allocation11 + $0x54] sm:$0xf]
        %v843 = vld [vmem:[#allocation11 + $0x58] sm:$0xf]
        %v844 = vld [vmem:[#allocation11 + $0x5c] sm:$0xf]
        %v845 = vld [vmem:[#allocation11 + $0x60] sm:$0xf]
        %v846 = vld [vmem:[#allocation11 + $0x64] sm:$0xf]
        %v847 = vld [vmem:[#allocation11 + $0x68] sm:$0xf]
        %v848 = vld [vmem:[#allocation11 + $0x6c] sm:$0xf]
        %v849 = vld [vmem:[#allocation11 + $0x70] sm:$0xf]
        %v850 = vld [vmem:[#allocation11 + $0x74] sm:$0xf]
        %v851 = vld [vmem:[#allocation11 + $0x78] sm:$0xf]
        %v852 = vld [vmem:[#allocation11 + $0x7c] sm:$0xf]
        %v853 = vlaneseq
        %v854 = vshrl.u32 %v853, 7
        %v855 = vsub.s32 0, %v854
        %v856 = vrot.slane %v813, %v855
        %v858 = vunpack.c.l.b16 %v820
        %v859 = vunpack.c.h.b16 %v820
        %v860 = vpack.c.b16 %v858, %v858
        %v861 = vpack.c.b16 %v859, %v859
        %v896 = vunpack.c.l.b16 %v821
        %v897 = vunpack.c.l.b16 %v822
        %v898 = vunpack.c.l.b16 %v823
        %v899 = vunpack.c.l.b16 %v824
        %v900 = vunpack.c.l.b16 %v825
        %v901 = vunpack.c.l.b16 %v826
        %v902 = vunpack.c.l.b16 %v827
        %v903 = vunpack.c.l.b16 %v828
        %v904 = vunpack.c.l.b16 %v829
        %v905 = vunpack.c.l.b16 %v830
        %v906 = vunpack.c.l.b16 %v831
        %v907 = vunpack.c.l.b16 %v832
        %v908 = vunpack.c.l.b16 %v833
        %v909 = vunpack.c.l.b16 %v834
        %v910 = vunpack.c.l.b16 %v835
        %v911 = vunpack.c.l.b16 %v836
        %v912 = vunpack.c.l.b16 %v837
        %v913 = vunpack.c.l.b16 %v838
        %v914 = vunpack.c.l.b16 %v839
        %v915 = vunpack.c.l.b16 %v840
        %v916 = vunpack.c.l.b16 %v841
        %v917 = vunpack.c.l.b16 %v842
        %v918 = vunpack.c.l.b16 %v843
        %v919 = vunpack.c.l.b16 %v844
        %v920 = vunpack.c.l.b16 %v845
        %v921 = vunpack.c.l.b16 %v846
        %v922 = vunpack.c.l.b16 %v847
        %v923 = vunpack.c.l.b16 %v848
        %v924 = vunpack.c.l.b16 %v849
        %v925 = vunpack.c.l.b16 %v850
        %v926 = vunpack.c.l.b16 %v851
        %v927 = vunpack.c.l.b16 %v852
        %v928 = vpack.c.b16 %v897, %v896
        %v929 = vpack.c.b16 %v899, %v898
        %v930 = vpack.c.b16 %v901, %v900
        %v931 = vpack.c.b16 %v903, %v902
        %v932 = vpack.c.b16 %v905, %v904
        %v933 = vpack.c.b16 %v907, %v906
        %v934 = vpack.c.b16 %v909, %v908
        %v935 = vpack.c.b16 %v911, %v910
        %v936 = vpack.c.b16 %v913, %v912
        %v937 = vpack.c.b16 %v915, %v914
        %v938 = vpack.c.b16 %v917, %v916
        %v939 = vpack.c.b16 %v919, %v918
        %v940 = vpack.c.b16 %v921, %v920
        %v941 = vpack.c.b16 %v923, %v922
        %v942 = vpack.c.b16 %v925, %v924
        %v943 = vpack.c.b16 %v927, %v926
        %960 = vmatprep.subr.bf16.mxu0 0
        %961 = vmatpush1.bf16.msra.mxu0 %v935
        %962 = vmatprep.subr.bf16.mxu0 0
        %963 = vmatpush1.bf16.msra.mxu0 %v934
        %964 = vmatprep.subr.bf16.mxu0 0
        %965 = vmatpush1.bf16.msra.mxu0 %v933
        %966 = vmatprep.subr.bf16.mxu0 0
        %967 = vmatpush1.bf16.msra.mxu0 %v932
        %968 = vmatprep.subr.bf16.mxu0 0
        %969 = vmatpush1.bf16.msra.mxu0 %v931
        %970 = vmatprep.subr.bf16.mxu0 0
        %971 = vmatpush1.bf16.msra.mxu0 %v930
        %972 = vmatprep.subr.bf16.mxu0 0
        %973 = vmatpush1.bf16.msra.mxu0 %v929
        %974 = vmatprep.subr.bf16.mxu0 0
        %975 = vmatpush1.bf16.msra.mxu0 %v928
        %976 = vmatprep.subr.bf16.mxu0 0
        %977 = vmatpush2.bf16.msra.mxu0 %v943
        %978 = vmatprep.subr.bf16.mxu0 0
        %979 = vmatpush2.bf16.msra.mxu0 %v942
        %980 = vmatprep.subr.bf16.mxu0 0
        %981 = vmatpush2.bf16.msra.mxu0 %v941
        %982 = vmatprep.subr.bf16.mxu0 0
        %983 = vmatpush2.bf16.msra.mxu0 %v940
        %984 = vmatprep.subr.bf16.mxu0 0
        %985 = vmatpush2.bf16.msra.mxu0 %v939
        %986 = vmatprep.subr.bf16.mxu0 0
        %987 = vmatpush2.bf16.msra.mxu0 %v938
        %988 = vmatprep.subr.bf16.mxu0 0
        %989 = vmatpush2.bf16.msra.mxu0 %v937
        %990 = vmatprep.subr.bf16.mxu0 0
        %991 = vmatpush2.bf16.msra.mxu0 %v936
        %992 = vmatprep.mubr.bf16.mxu0 %v861
        %993 = vmatmul.mubr.bf16.gmra.mxu0 %v860
        %v994 = vpop.f32.mrf.mxu0
        %v995 = vadd.f32 %v856, %v994
        %v996 = vpop.f32.mrf.mxu0
        %v997 = vpop.f32.mrf.mxu0
        %v998 = vpop.f32.mrf.mxu0
        %999 = vdwg.mxu0
        %v1000 = vld [vmem:[#allocation8] sm:$0xff]
        %v1001 = vld [vmem:[#allocation10] sm:$0xff]
        %v1002 = vld [vmem:[%s5] sm:$0xff]
        %v1003 = vmul.f32 %v995, %v1000
        %v1004 = vmul.f32 %v995, %v1001
        %1005 = vrot.lane.b32.xlu0 %v1004, 127
        %v1006 = vpop.permute.xlu0 %1005
        %v1007 = vadd.f32 %v1003, %v1006
        %v1008 = vmul.f32 %v995, %v1002
        %1009 = vrot.lane.b32.xlu0 %v1008, 1
        %v1010 = vpop.permute.xlu0 %1009
        %v1011 = vadd.f32 %v1007, %v1010
        %v1012 = vld [vmem:[%s706] sm:$0x1]
        %v1014 = vlaneseq
        %v1015 = vshrl.u32 %v1014, 7
        %v1016 = vsub.s32 0, %v1015
        %v1017 = vrot.slane %v1012, %v1016
        %v1019 = vadd.f32 %v1011, %v1017
        %v1020 = vpack.c.bf16 %v1019, %v1019
        %v1021 = vld [vmem:[#allocation13] sm:$0xff]
        %v1022 = vld [vmem:[#allocation13 + $0x8] sm:$0xf]
        %v1023 = vld [vmem:[#allocation13 + $0xc] sm:$0xff]
        %v1024 = vld [vmem:[#allocation13 + $0x14] sm:$0xf]
        %v1025 = vld [vmem:[#allocation13 + $0x18] sm:$0xff]
        %v1026 = vld [vmem:[#allocation13 + $0x20] sm:$0xf]
        %v1027 = vld [vmem:[#allocation13 + $0x24] sm:$0xff]
        %v1028 = vld [vmem:[#allocation13 + $0x2c] sm:$0xf]
        %v1029 = vld [vmem:[#allocation13 + $0x30] sm:$0xff]
        %v1030 = vld [vmem:[#allocation13 + $0x38] sm:$0xf]
        %v1031 = vld [vmem:[#allocation13 + $0x3c] sm:$0xff]
        %v1032 = vld [vmem:[#allocation13 + $0x44] sm:$0xf]
        %v1033 = vld [vmem:[#allocation13 + $0x48] sm:$0xff]
        %v1034 = vld [vmem:[#allocation13 + $0x50] sm:$0xf]
        %v1035 = vld [vmem:[#allocation13 + $0x54] sm:$0xff]
        %v1036 = vld [vmem:[#allocation13 + $0x5c] sm:$0xf]
        %v1037 = vld [vmem:[#allocation13 + $0x60] sm:$0xff]
        %v1038 = vld [vmem:[#allocation13 + $0x68] sm:$0xf]
        %v1039 = vld [vmem:[#allocation13 + $0x6c] sm:$0xff]
        %v1040 = vld [vmem:[#allocation13 + $0x74] sm:$0xf]
        %v1041 = vld [vmem:[#allocation13 + $0x78] sm:$0xff]
        %v1042 = vld [vmem:[#allocation13 + $0x80] sm:$0xf]
        %v1043 = vld [vmem:[#allocation13 + $0x84] sm:$0xff]
        %v1044 = vld [vmem:[#allocation13 + $0x8c] sm:$0xf]
        %v1045 = vld [vmem:[#allocation13 + $0x90] sm:$0xff]
        %v1046 = vld [vmem:[#allocation13 + $0x98] sm:$0xf]
        %v1047 = vld [vmem:[#allocation13 + $0x9c] sm:$0xff]
        %v1048 = vld [vmem:[#allocation13 + $0xa4] sm:$0xf]
        %v1049 = vld [vmem:[#allocation13 + $0xa8] sm:$0xff]
        %v1050 = vld [vmem:[#allocation13 + $0xb0] sm:$0xf]
        %v1051 = vld [vmem:[#allocation13 + $0xb4] sm:$0xff]
        %v1052 = vld [vmem:[#allocation13 + $0xbc] sm:$0xf]
        %v1053 = vld [vmem:[#allocation14] sm:$0x7]
        %v1055 = vlaneseq
        %v1056 = vshrl.u32 %v1055, 7
        %v1057 = vsub.s32 0, %v1056
        %v1058 = vrot.slane %v1053, %v1057
        %v1059 = vlaneseq
        %v1060 = vshrl.u32 %v1059, 7
        %v1061 = vsub.s32 1, %v1060
        %v1062 = vrot.slane %v1053, %v1061
        %v1063 = vlaneseq
        %v1064 = vshrl.u32 %v1063, 7
        %v1065 = vsub.s32 2, %v1064
        %v1066 = vrot.slane %v1053, %v1065
        %v1102 = vunpack.c.l.b16 %v1021
        %v1103 = vunpack.c.h.b16 %v1021
        %v1104 = vunpack.c.l.b16 %v1022
        %v1105 = vunpack.c.l.b16 %v1023
        %v1106 = vunpack.c.h.b16 %v1023
        %v1107 = vunpack.c.l.b16 %v1024
        %v1108 = vunpack.c.l.b16 %v1025
        %v1109 = vunpack.c.h.b16 %v1025
        %v1110 = vunpack.c.l.b16 %v1026
        %v1111 = vunpack.c.l.b16 %v1027
        %v1112 = vunpack.c.h.b16 %v1027
        %v1113 = vunpack.c.l.b16 %v1028
        %v1114 = vunpack.c.l.b16 %v1029
        %v1115 = vunpack.c.h.b16 %v1029
        %v1116 = vunpack.c.l.b16 %v1030
        %v1117 = vunpack.c.l.b16 %v1031
        %v1118 = vunpack.c.h.b16 %v1031
        %v1119 = vunpack.c.l.b16 %v1032
        %v1120 = vunpack.c.l.b16 %v1033
        %v1121 = vunpack.c.h.b16 %v1033
        %v1122 = vunpack.c.l.b16 %v1034
        %v1123 = vunpack.c.l.b16 %v1035
        %v1124 = vunpack.c.h.b16 %v1035
        %v1125 = vunpack.c.l.b16 %v1036
        %v1126 = vunpack.c.l.b16 %v1037
        %v1127 = vunpack.c.h.b16 %v1037
        %v1128 = vunpack.c.l.b16 %v1038
        %v1129 = vunpack.c.l.b16 %v1039
        %v1130 = vunpack.c.h.b16 %v1039
        %v1131 = vunpack.c.l.b16 %v1040
        %v1132 = vunpack.c.l.b16 %v1041
        %v1133 = vunpack.c.h.b16 %v1041
        %v1134 = vunpack.c.l.b16 %v1042
        %v1135 = vunpack.c.l.b16 %v1043
        %v1136 = vunpack.c.h.b16 %v1043
        %v1137 = vunpack.c.l.b16 %v1044
        %v1138 = vunpack.c.l.b16 %v1045
        %v1139 = vunpack.c.h.b16 %v1045
        %v1140 = vunpack.c.l.b16 %v1046
        %v1141 = vunpack.c.l.b16 %v1047
        %v1142 = vunpack.c.h.b16 %v1047
        %v1143 = vunpack.c.l.b16 %v1048
        %v1144 = vunpack.c.l.b16 %v1049
        %v1145 = vunpack.c.h.b16 %v1049
        %v1146 = vunpack.c.l.b16 %v1050
        %v1147 = vunpack.c.l.b16 %v1051
        %v1148 = vunpack.c.h.b16 %v1051
        %v1149 = vunpack.c.l.b16 %v1052
        %v1150 = vpack.c.b16 %v1105, %v1102
        %v1151 = vpack.c.b16 %v1106, %v1103
        %v1152 = vpack.c.b16 %v1107, %v1104
        %v1153 = vpack.c.b16 %v1111, %v1108
        %v1154 = vpack.c.b16 %v1112, %v1109
        %v1155 = vpack.c.b16 %v1113, %v1110
        %v1156 = vpack.c.b16 %v1117, %v1114
        %v1157 = vpack.c.b16 %v1118, %v1115
        %v1158 = vpack.c.b16 %v1119, %v1116
        %v1159 = vpack.c.b16 %v1123, %v1120
        %v1160 = vpack.c.b16 %v1124, %v1121
        %v1161 = vpack.c.b16 %v1125, %v1122
        %v1162 = vpack.c.b16 %v1129, %v1126
        %v1163 = vpack.c.b16 %v1130, %v1127
        %v1164 = vpack.c.b16 %v1131, %v1128
        %v1165 = vpack.c.b16 %v1135, %v1132
        %v1166 = vpack.c.b16 %v1136, %v1133
        %v1167 = vpack.c.b16 %v1137, %v1134
        %v1168 = vpack.c.b16 %v1141, %v1138
        %v1169 = vpack.c.b16 %v1142, %v1139
        %v1170 = vpack.c.b16 %v1143, %v1140
        %v1171 = vpack.c.b16 %v1147, %v1144
        %v1172 = vpack.c.b16 %v1148, %v1145
        %v1173 = vpack.c.b16 %v1149, %v1146
        %1198 = vmatprep.subr.bf16.mxu0 %v1172
        %1199 = vmatpush1.bf16.msra.mxu0 %v1171
        %1200 = vmatprep.subr.bf16.mxu0 %v1169
        %1201 = vmatpush1.bf16.msra.mxu0 %v1168
        %1202 = vmatprep.subr.bf16.mxu0 %v1166
        %1203 = vmatpush1.bf16.msra.mxu0 %v1165
        %1204 = vmatprep.subr.bf16.mxu0 %v1163
        %1205 = vmatpush1.bf16.msra.mxu0 %v1162
        %1206 = vmatprep.subr.bf16.mxu0 %v1160
        %1207 = vmatpush1.bf16.msra.mxu0 %v1159
        %1208 = vmatprep.subr.bf16.mxu0 %v1157
        %1209 = vmatpush1.bf16.msra.mxu0 %v1156
        %1210 = vmatprep.subr.bf16.mxu0 %v1154
        %1211 = vmatpush1.bf16.msra.mxu0 %v1153
        %1212 = vmatprep.subr.bf16.mxu0 %v1151
        %1213 = vmatpush1.bf16.msra.mxu0 %v1150
        %1214 = vmatprep.subr.bf16.mxu0 0
        %1215 = vmatpush2.bf16.msra.mxu0 0
        %1216 = vmatprep.subr.bf16.mxu0 0
        %1217 = vmatpush2.bf16.msra.mxu0 0
        %1218 = vmatprep.subr.bf16.mxu0 0
        %1219 = vmatpush2.bf16.msra.mxu0 0
        %1220 = vmatprep.subr.bf16.mxu0 0
        %1221 = vmatpush2.bf16.msra.mxu0 0
        %1222 = vmatprep.subr.bf16.mxu0 0
        %1223 = vmatpush2.bf16.msra.mxu0 0
        %1224 = vmatprep.subr.bf16.mxu0 0
        %1225 = vmatpush2.bf16.msra.mxu0 0
        %1226 = vmatprep.subr.bf16.mxu0 0
        %1227 = vmatpush2.bf16.msra.mxu0 0
        %1228 = vmatprep.subr.bf16.mxu0 0
        %1229 = vmatpush2.bf16.msra.mxu0 0
        %1230 = vmatprep.mubr.bf16.mxu0 0
        %1231 = vmatmul.mubr.bf16.gmra.mxu0 %v1020
        %v1232 = vpop.f32.mrf.mxu0
        %v1233 = vadd.f32 %v1058, %v1232
        %v1234 = vpop.f32.mrf.mxu0
        %v1235 = vadd.f32 %v1062, %v1234
        %v1236 = vpop.f32.mrf.mxu0
        %v1237 = vpop.f32.mrf.mxu0
        %1238 = vdwg.mxu0
        %1239 = vmatprep.subr.bf16.mxu0 0
        %1240 = vmatpush1.bf16.msra.mxu0 %v1173
        %1241 = vmatprep.subr.bf16.mxu0 0
        %1242 = vmatpush1.bf16.msra.mxu0 %v1170
        %1243 = vmatprep.subr.bf16.mxu0 0
        %1244 = vmatpush1.bf16.msra.mxu0 %v1167
        %1245 = vmatprep.subr.bf16.mxu0 0
        %1246 = vmatpush1.bf16.msra.mxu0 %v1164
        %1247 = vmatprep.subr.bf16.mxu0 0
        %1248 = vmatpush1.bf16.msra.mxu0 %v1161
        %1249 = vmatprep.subr.bf16.mxu0 0
        %1250 = vmatpush1.bf16.msra.mxu0 %v1158
        %1251 = vmatprep.subr.bf16.mxu0 0
        %1252 = vmatpush1.bf16.msra.mxu0 %v1155
        %1253 = vmatprep.subr.bf16.mxu0 0
        %1254 = vmatpush1.bf16.msra.mxu0 %v1152
        %1255 = vmatprep.subr.bf16.mxu0 0
        %1256 = vmatpush2.bf16.msra.mxu0 0
        %1257 = vmatprep.subr.bf16.mxu0 0
        %1258 = vmatpush2.bf16.msra.mxu0 0
        %1259 = vmatprep.subr.bf16.mxu0 0
        %1260 = vmatpush2.bf16.msra.mxu0 0
        %1261 = vmatprep.subr.bf16.mxu0 0
        %1262 = vmatpush2.bf16.msra.mxu0 0
        %1263 = vmatprep.subr.bf16.mxu0 0
        %1264 = vmatpush2.bf16.msra.mxu0 0
        %1265 = vmatprep.subr.bf16.mxu0 0
        %1266 = vmatpush2.bf16.msra.mxu0 0
        %1267 = vmatprep.subr.bf16.mxu0 0
        %1268 = vmatpush2.bf16.msra.mxu0 0
        %1269 = vmatprep.subr.bf16.mxu0 0
        %1270 = vmatpush2.bf16.msra.mxu0 0
        %1271 = vmatprep.mubr.bf16.mxu0 0
        %1272 = vmatmul.mubr.bf16.gmra.mxu0 %v1020
        %v1273 = vpop.f32.mrf.mxu0
        %v1274 = vadd.f32 %v1066, %v1273
        %v1275 = vpop.f32.mrf.mxu0
        %v1276 = vpop.f32.mrf.mxu0
        %v1277 = vpop.f32.mrf.mxu0
        %1278 = vdwg.mxu0
        %v1279 = vld [vmem:[%s698] sm:$0xf]
        %v1280 = vld [vmem:[#allocation16] sm:$0xff]
        %v1281 = vld [vmem:[#allocation16 + $0x8] sm:$0xff]
        %v1282 = vld [vmem:[#allocation16 + $0x10] sm:$0xff]
        %v1283 = vld [vmem:[#allocation16 + $0x18] sm:$0xff]
        %v1284 = vld [vmem:[#allocation16 + $0x20] sm:$0xff]
        %v1285 = vld [vmem:[#allocation16 + $0x28] sm:$0xff]
        %v1286 = vld [vmem:[#allocation16 + $0x30] sm:$0xff]
        %v1287 = vld [vmem:[#allocation16 + $0x38] sm:$0xff]
        %v1288 = vld [vmem:[#allocation16 + $0x40] sm:$0xff]
        %v1289 = vld [vmem:[#allocation16 + $0x48] sm:$0xff]
        %v1290 = vld [vmem:[#allocation16 + $0x50] sm:$0xff]
        %v1291 = vld [vmem:[#allocation16 + $0x58] sm:$0xff]
        %v1292 = vld [vmem:[#allocation16 + $0x60] sm:$0xff]
        %v1293 = vld [vmem:[#allocation16 + $0x68] sm:$0xff]
        %v1294 = vld [vmem:[#allocation16 + $0x70] sm:$0xff]
        %v1295 = vld [vmem:[#allocation16 + $0x78] sm:$0xff]
        %v1296 = vld [vmem:[#allocation17] sm:$0x3]
        %v1298 = vlaneseq
        %v1299 = vshrl.u32 %v1298, 7
        %v1300 = vsub.s32 0, %v1299
        %v1301 = vrot.slane %v1296, %v1300
        %v1302 = vlaneseq
        %v1303 = vshrl.u32 %v1302, 7
        %v1304 = vsub.s32 1, %v1303
        %v1305 = vrot.slane %v1296, %v1304
        %v1324 = vunpack.c.l.b16 %v1280
        %v1325 = vunpack.c.h.b16 %v1280
        %v1326 = vunpack.c.l.b16 %v1281
        %v1327 = vunpack.c.h.b16 %v1281
        %v1328 = vunpack.c.l.b16 %v1282
        %v1329 = vunpack.c.h.b16 %v1282
        %v1330 = vunpack.c.l.b16 %v1283
        %v1331 = vunpack.c.h.b16 %v1283
        %v1332 = vunpack.c.l.b16 %v1284
        %v1333 = vunpack.c.h.b16 %v1284
        %v1334 = vunpack.c.l.b16 %v1285
        %v1335 = vunpack.c.h.b16 %v1285
        %v1336 = vunpack.c.l.b16 %v1286
        %v1337 = vunpack.c.h.b16 %v1286
        %v1338 = vunpack.c.l.b16 %v1287
        %v1339 = vunpack.c.h.b16 %v1287
        %v1340 = vunpack.c.l.b16 %v1288
        %v1341 = vunpack.c.h.b16 %v1288
        %v1342 = vunpack.c.l.b16 %v1289
        %v1343 = vunpack.c.h.b16 %v1289
        %v1344 = vunpack.c.l.b16 %v1290
        %v1345 = vunpack.c.h.b16 %v1290
        %v1346 = vunpack.c.l.b16 %v1291
        %v1347 = vunpack.c.h.b16 %v1291
        %v1348 = vunpack.c.l.b16 %v1292
        %v1349 = vunpack.c.h.b16 %v1292
        %v1350 = vunpack.c.l.b16 %v1293
        %v1351 = vunpack.c.h.b16 %v1293
        %v1352 = vunpack.c.l.b16 %v1294
        %v1353 = vunpack.c.h.b16 %v1294
        %v1354 = vunpack.c.l.b16 %v1295
        %v1355 = vunpack.c.h.b16 %v1295
        %v1356 = vpack.c.b16 %v1326, %v1324
        %v1357 = vpack.c.b16 %v1327, %v1325
        %v1358 = vpack.c.b16 %v1330, %v1328
        %v1359 = vpack.c.b16 %v1331, %v1329
        %v1360 = vpack.c.b16 %v1334, %v1332
        %v1361 = vpack.c.b16 %v1335, %v1333
        %v1362 = vpack.c.b16 %v1338, %v1336
        %v1363 = vpack.c.b16 %v1339, %v1337
        %v1364 = vpack.c.b16 %v1342, %v1340
        %v1365 = vpack.c.b16 %v1343, %v1341
        %v1366 = vpack.c.b16 %v1346, %v1344
        %v1367 = vpack.c.b16 %v1347, %v1345
        %v1368 = vpack.c.b16 %v1350, %v1348
        %v1369 = vpack.c.b16 %v1351, %v1349
        %v1370 = vpack.c.b16 %v1354, %v1352
        %v1371 = vpack.c.b16 %v1355, %v1353
        %1388 = vmatprep.subr.bf16.mxu0 %v1371
        %1389 = vmatpush1.bf16.msra.mxu0 %v1370
        %1390 = vmatprep.subr.bf16.mxu0 %v1369
        %1391 = vmatpush1.bf16.msra.mxu0 %v1368
        %1392 = vmatprep.subr.bf16.mxu0 %v1367
        %1393 = vmatpush1.bf16.msra.mxu0 %v1366
        %1394 = vmatprep.subr.bf16.mxu0 %v1365
        %1395 = vmatpush1.bf16.msra.mxu0 %v1364
        %1396 = vmatprep.subr.bf16.mxu0 %v1363
        %1397 = vmatpush1.bf16.msra.mxu0 %v1362
        %1398 = vmatprep.subr.bf16.mxu0 %v1361
        %1399 = vmatpush1.bf16.msra.mxu0 %v1360
        %1400 = vmatprep.subr.bf16.mxu0 %v1359
        %1401 = vmatpush1.bf16.msra.mxu0 %v1358
        %1402 = vmatprep.subr.bf16.mxu0 %v1357
        %1403 = vmatpush1.bf16.msra.mxu0 %v1356
        %1404 = vmatprep.subr.bf16.mxu0 0
        %1405 = vmatpush2.bf16.msra.mxu0 0
        %1406 = vmatprep.subr.bf16.mxu0 0
        %1407 = vmatpush2.bf16.msra.mxu0 0
        %1408 = vmatprep.subr.bf16.mxu0 0
        %1409 = vmatpush2.bf16.msra.mxu0 0
        %1410 = vmatprep.subr.bf16.mxu0 0
        %1411 = vmatpush2.bf16.msra.mxu0 0
        %1412 = vmatprep.subr.bf16.mxu0 0
        %1413 = vmatpush2.bf16.msra.mxu0 0
        %1414 = vmatprep.subr.bf16.mxu0 0
        %1415 = vmatpush2.bf16.msra.mxu0 0
        %1416 = vmatprep.subr.bf16.mxu0 0
        %1417 = vmatpush2.bf16.msra.mxu0 0
        %1418 = vmatprep.subr.bf16.mxu0 0
        %1419 = vmatpush2.bf16.msra.mxu0 0
        %1420 = vmatprep.mubr.bf16.mxu0 0
        %1421 = vmatmul.mubr.bf16.gmra.mxu0 %v1279
        %v1422 = vpop.f32.mrf.mxu0
        %v1423 = vadd.f32 %v1301, %v1422
        %v1424 = vpop.f32.mrf.mxu0
        %v1425 = vadd.f32 %v1305, %v1424
        %v1426 = vpop.f32.mrf.mxu0
        %v1427 = vpop.f32.mrf.mxu0
        %1428 = vdwg.mxu0
        %v1429 = vpack.c.bf16 %v1233, %v1233
        %v1430 = vpack.c.bf16 %v1423, %v1423
        %1431 = vmatprep.subr.bf16.mxu0 0
        %1432 = vmatpush1.bf16.xpose.msra.mxu0 0
        %1433 = vmatprep.subr.bf16.mxu0 0
        %1434 = vmatpush1.bf16.xpose.msra.mxu0 0
        %1435 = vmatprep.subr.bf16.mxu0 0
        %1436 = vmatpush1.bf16.xpose.msra.mxu0 0
        %1437 = vmatprep.subr.bf16.mxu0 0
        %1438 = vmatpush1.bf16.xpose.msra.mxu0 0
        %1439 = vmatprep.subr.bf16.mxu0 0
        %1440 = vmatpush1.bf16.xpose.msra.mxu0 0
        %1441 = vmatprep.subr.bf16.mxu0 0
        %1442 = vmatpush1.bf16.xpose.msra.mxu0 0
        %1443 = vmatprep.subr.bf16.mxu0 0
        %1444 = vmatpush1.bf16.xpose.msra.mxu0 0
        %1445 = vmatprep.subr.bf16.mxu0 0
        %1446 = vmatpush1.bf16.xpose.msra.mxu0 %v1430
        %1447 = vmatprep.subr.bf16.mxu0 0
        %1448 = vmatpush2.bf16.xpose.msra.mxu0 0
        %1449 = vmatprep.subr.bf16.mxu0 0
        %1450 = vmatpush2.bf16.xpose.msra.mxu0 0
        %1451 = vmatprep.subr.bf16.mxu0 0
        %1452 = vmatpush2.bf16.xpose.msra.mxu0 0
        %1453 = vmatprep.subr.bf16.mxu0 0
        %1454 = vmatpush2.bf16.xpose.msra.mxu0 0
        %1455 = vmatprep.subr.bf16.mxu0 0
        %1456 = vmatpush2.bf16.xpose.msra.mxu0 0
        %1457 = vmatprep.subr.bf16.mxu0 0
        %1458 = vmatpush2.bf16.xpose.msra.mxu0 0
        %1459 = vmatprep.subr.bf16.mxu0 0
        %1460 = vmatpush2.bf16.xpose.msra.mxu0 0
        %1461 = vmatprep.subr.bf16.mxu0 0
        %1462 = vmatpush2.bf16.xpose.msra.mxu0 0
        %1463 = vmatprep.mubr.bf16.mxu0 0
        %1464 = vmatmul.mubr.bf16.gmra.mxu0 %v1429
        %v1465 = vpop.f32.mrf.mxu0
        %v1466 = vadd.f32 0.0, %v1465
        %v1467 = vpop.f32.mrf.mxu0
        %v1468 = vpop.f32.mrf.mxu0
        %v1469 = vpop.f32.mrf.mxu0
        %1470 = vdwg.mxu0
        %v1471 = vpack.c.bf16 %v1235, %v1235
        %1472 = vmatprep.subr.bf16.mxu0 0
        %1473 = vmatpush1.bf16.xpose.msra.mxu0 0
        %1474 = vmatprep.subr.bf16.mxu0 0
        %1475 = vmatpush1.bf16.xpose.msra.mxu0 0
        %1476 = vmatprep.subr.bf16.mxu0 0
        %1477 = vmatpush1.bf16.xpose.msra.mxu0 0
        %1478 = vmatprep.subr.bf16.mxu0 0
        %1479 = vmatpush1.bf16.xpose.msra.mxu0 0
        %1480 = vmatprep.subr.bf16.mxu0 0
        %1481 = vmatpush1.bf16.xpose.msra.mxu0 0
        %1482 = vmatprep.subr.bf16.mxu0 0
        %1483 = vmatpush1.bf16.xpose.msra.mxu0 0
        %1484 = vmatprep.subr.bf16.mxu0 0
        %1485 = vmatpush1.bf16.xpose.msra.mxu0 0
        %1486 = vmatprep.subr.bf16.mxu0 0
        %1487 = vmatpush1.bf16.xpose.msra.mxu0 %v1471
        %1488 = vmatprep.subr.bf16.mxu0 0
        %1489 = vmatpush2.bf16.xpose.msra.mxu0 0
        %1490 = vmatprep.subr.bf16.mxu0 0
        %1491 = vmatpush2.bf16.xpose.msra.mxu0 0
        %1492 = vmatprep.subr.bf16.mxu0 0
        %1493 = vmatpush2.bf16.xpose.msra.mxu0 0
        %1494 = vmatprep.subr.bf16.mxu0 0
        %1495 = vmatpush2.bf16.xpose.msra.mxu0 0
        %1496 = vmatprep.subr.bf16.mxu0 0
        %1497 = vmatpush2.bf16.xpose.msra.mxu0 0
        %1498 = vmatprep.subr.bf16.mxu0 0
        %1499 = vmatpush2.bf16.xpose.msra.mxu0 0
        %1500 = vmatprep.subr.bf16.mxu0 0
        %1501 = vmatpush2.bf16.xpose.msra.mxu0 0
        %1502 = vmatprep.subr.bf16.mxu0 0
        %1503 = vmatpush2.bf16.xpose.msra.mxu0 0
        %1504 = vmatprep.mubr.bf16.mxu0 0
        %1505 = vmatmul.mubr.bf16.gmra.mxu0 %v1429
        %v1506 = vpop.f32.mrf.mxu0
        %v1507 = vadd.f32 0.0, %v1506
        %v1508 = vpop.f32.mrf.mxu0
        %v1509 = vpop.f32.mrf.mxu0
        %v1510 = vpop.f32.mrf.mxu0
        %1511 = vdwg.mxu0
        %1513 = vrot.lane.b32.xlu0 %v1507, 8
        %v1514 = vpop.permute.xlu0 %1513
        %vm1516 = vcmask 64512
        %v1517 = vsel %vm1516, %v1466, %v1514
        %vm1518 = vcmask 130048
        %v1519 = vsel %vm1518, %v1517, -inf
        %1520 = vmax.xlane.f32.xlu0 %v1519
        %v1521 = vpop.xlane.xlu0 %1520
        %v1522 = vsub.f32 %v1517, %v1521
        %v1523 = vmul.f32 %v1522, 1.442695
        %v1524 = vpow.pop %v1523
        %v1525 = vsel %vm1518, %v1524, 0.0
        %1526 = vadd.xlane.f32.xlu0 %v1525
        %v1527 = vpop.xlane.xlu0 %1526
        %v1528 = vrcp.pop %v1527
        %v1529 = vmul.f32 %v1524, %v1528
        %v1530 = vpack.c.bf16 %v1529, %v1529
        %v1531 = vpack.c.bf16 %v1425, %v1425
        %v1532 = vpack.c.bf16 %v1274, %v1274
        %1534 = vrot.lane.b32.xlu0 %v1530, 120
        %v1535 = vpop.permute.xlu0 %1534
        %v1537 = vsel %vm1516, %v1535, 0
        %vm1539 = vcmask 1043456
        %v1541 = vsel %vm1539, %v1532, 0
        %1543 = vmatprep.subr.bf16.mxu0 0
        %1544 = vmatpush1.bf16.msra.mxu0 0
        %1545 = vmatprep.subr.bf16.mxu0 0
        %1546 = vmatpush1.bf16.msra.mxu0 0
        %1547 = vmatprep.subr.bf16.mxu0 0
        %1548 = vmatpush1.bf16.msra.mxu0 0
        %1549 = vmatprep.subr.bf16.mxu0 0
        %1550 = vmatpush1.bf16.msra.mxu0 0
        %1551 = vmatprep.subr.bf16.mxu0 0
        %1552 = vmatpush1.bf16.msra.mxu0 0
        %1553 = vmatprep.subr.bf16.mxu0 0
        %1554 = vmatpush1.bf16.msra.mxu0 0
        %1555 = vmatprep.subr.bf16.mxu0 0
        %1556 = vmatpush1.bf16.msra.mxu0 0
        %1557 = vmatprep.subr.bf16.mxu0 0
        %1558 = vmatpush1.bf16.msra.mxu0 %v1541
        %1559 = vmatprep.subr.bf16.mxu0 0
        %1560 = vmatpush2.bf16.msra.mxu0 0
        %1561 = vmatprep.subr.bf16.mxu0 0
        %1562 = vmatpush2.bf16.msra.mxu0 0
        %1563 = vmatprep.subr.bf16.mxu0 0
        %1564 = vmatpush2.bf16.msra.mxu0 0
        %1565 = vmatprep.subr.bf16.mxu0 0
        %1566 = vmatpush2.bf16.msra.mxu0 0
        %1567 = vmatprep.subr.bf16.mxu0 0
        %1568 = vmatpush2.bf16.msra.mxu0 0
        %1569 = vmatprep.subr.bf16.mxu0 0
        %1570 = vmatpush2.bf16.msra.mxu0 0
        %1571 = vmatprep.subr.bf16.mxu0 0
        %1572 = vmatpush2.bf16.msra.mxu0 0
        %1573 = vmatprep.subr.bf16.mxu0 0
        %1574 = vmatpush2.bf16.msra.mxu0 0
        %1575 = vmatprep.mubr.bf16.mxu0 0
        %1576 = vmatmul.mubr.bf16.gmra.mxu0 %v1537
        %v1577 = vpop.f32.mrf.mxu0
        %v1578 = vadd.f32 0.0, %v1577
        %v1579 = vpop.f32.mrf.mxu0
        %v1580 = vpop.f32.mrf.mxu0
        %v1581 = vpop.f32.mrf.mxu0
        %1582 = vdwg.mxu0
        %v1584 = vsel %vm1516, %v1530, 0
        %v1587 = vsel %vm1539, %v1531, 0
        %1589 = vmatprep.subr.bf16.mxu0 0
        %1590 = vmatpush1.bf16.msra.mxu0 0
        %1591 = vmatprep.subr.bf16.mxu0 0
        %1592 = vmatpush1.bf16.msra.mxu0 0
        %1593 = vmatprep.subr.bf16.mxu0 0
        %1594 = vmatpush1.bf16.msra.mxu0 0
        %1595 = vmatprep.subr.bf16.mxu0 0
        %1596 = vmatpush1.bf16.msra.mxu0 0
        %1597 = vmatprep.subr.bf16.mxu0 0
        %1598 = vmatpush1.bf16.msra.mxu0 0
        %1599 = vmatprep.subr.bf16.mxu0 0
        %1600 = vmatpush1.bf16.msra.mxu0 0
        %1601 = vmatprep.subr.bf16.mxu0 0
        %1602 = vmatpush1.bf16.msra.mxu0 0
        %1603 = vmatprep.subr.bf16.mxu0 0
        %1604 = vmatpush1.bf16.msra.mxu0 %v1587
        %1605 = vmatprep.subr.bf16.mxu0 0
        %1606 = vmatpush2.bf16.msra.mxu0 0
        %1607 = vmatprep.subr.bf16.mxu0 0
        %1608 = vmatpush2.bf16.msra.mxu0 0
        %1609 = vmatprep.subr.bf16.mxu0 0
        %1610 = vmatpush2.bf16.msra.mxu0 0
        %1611 = vmatprep.subr.bf16.mxu0 0
        %1612 = vmatpush2.bf16.msra.mxu0 0
        %1613 = vmatprep.subr.bf16.mxu0 0
        %1614 = vmatpush2.bf16.msra.mxu0 0
        %1615 = vmatprep.subr.bf16.mxu0 0
        %1616 = vmatpush2.bf16.msra.mxu0 0
        %1617 = vmatprep.subr.bf16.mxu0 0
        %1618 = vmatpush2.bf16.msra.mxu0 0
        %1619 = vmatprep.subr.bf16.mxu0 0
        %1620 = vmatpush2.bf16.msra.mxu0 0
        %1621 = vmatprep.mubr.bf16.mxu0 0
        %1622 = vmatmul.mubr.bf16.gmra.mxu0 %v1584
        %v1623 = vpop.f32.mrf.mxu0
        %v1624 = vadd.f32 %v1578, %v1623
        %v1625 = vpop.f32.mrf.mxu0
        %v1626 = vpop.f32.mrf.mxu0
        %v1627 = vpop.f32.mrf.mxu0
        %1628 = vdwg.mxu0
        %v1629 = vpack.c.bf16 %v1624, %v1624
        %v1630 = vld [vmem:[#allocation19] sm:$0xf]
        %v1631 = vld [vmem:[#allocation19 + $0x4] sm:$0xf]
        %v1632 = vld [vmem:[#allocation19 + $0x8] sm:$0xf]
        %v1633 = vld [vmem:[#allocation19 + $0xc] sm:$0xf]
        %v1634 = vld [vmem:[#allocation19 + $0x10] sm:$0xf]
        %v1635 = vld [vmem:[#allocation19 + $0x14] sm:$0xf]
        %v1636 = vld [vmem:[#allocation19 + $0x18] sm:$0xf]
        %v1637 = vld [vmem:[#allocation19 + $0x1c] sm:$0xf]
        %v1638 = vld [vmem:[#allocation19 + $0x20] sm:$0xf]
        %v1639 = vld [vmem:[#allocation19 + $0x24] sm:$0xf]
        %v1640 = vld [vmem:[#allocation19 + $0x28] sm:$0xf]
        %v1641 = vld [vmem:[#allocation19 + $0x2c] sm:$0xf]
        %v1642 = vld [vmem:[#allocation19 + $0x30] sm:$0xf]
        %v1643 = vld [vmem:[#allocation19 + $0x34] sm:$0xf]
        %v1644 = vld [vmem:[#allocation19 + $0x38] sm:$0xf]
        %v1645 = vld [vmem:[#allocation19 + $0x3c] sm:$0xf]
        %v1646 = vlaneseq
        %v1647 = vshrl.u32 %v1646, 7
        %v1648 = vsub.s32 0, %v1647
        %v1649 = vrot.slane %v814, %v1648
        %v1666 = vunpack.c.l.b16 %v1630
        %v1667 = vunpack.c.l.b16 %v1631
        %v1668 = vunpack.c.l.b16 %v1632
        %v1669 = vunpack.c.l.b16 %v1633
        %v1670 = vunpack.c.l.b16 %v1634
        %v1671 = vunpack.c.l.b16 %v1635
        %v1672 = vunpack.c.l.b16 %v1636
        %v1673 = vunpack.c.l.b16 %v1637
        %v1674 = vunpack.c.l.b16 %v1638
        %v1675 = vunpack.c.l.b16 %v1639
        %v1676 = vunpack.c.l.b16 %v1640
        %v1677 = vunpack.c.l.b16 %v1641
        %v1678 = vunpack.c.l.b16 %v1642
        %v1679 = vunpack.c.l.b16 %v1643
        %v1680 = vunpack.c.l.b16 %v1644
        %v1681 = vunpack.c.l.b16 %v1645
        %v1682 = vpack.c.b16 %v1667, %v1666
        %v1683 = vpack.c.b16 %v1669, %v1668
        %v1684 = vpack.c.b16 %v1671, %v1670
        %v1685 = vpack.c.b16 %v1673, %v1672
        %v1686 = vpack.c.b16 %v1675, %v1674
        %v1687 = vpack.c.b16 %v1677, %v1676
        %v1688 = vpack.c.b16 %v1679, %v1678
        %v1689 = vpack.c.b16 %v1681, %v1680
        %1698 = vmatprep.subr.bf16.mxu0 0
        %1699 = vmatpush1.bf16.msra.mxu0 %v1689
        %1700 = vmatprep.subr.bf16.mxu0 0
        %1701 = vmatpush1.bf16.msra.mxu0 %v1688
        %1702 = vmatprep.subr.bf16.mxu0 0
        %1703 = vmatpush1.bf16.msra.mxu0 %v1687
        %1704 = vmatprep.subr.bf16.mxu0 0
        %1705 = vmatpush1.bf16.msra.mxu0 %v1686
        %1706 = vmatprep.subr.bf16.mxu0 0
        %1707 = vmatpush1.bf16.msra.mxu0 %v1685
        %1708 = vmatprep.subr.bf16.mxu0 0
        %1709 = vmatpush1.bf16.msra.mxu0 %v1684
        %1710 = vmatprep.subr.bf16.mxu0 0
        %1711 = vmatpush1.bf16.msra.mxu0 %v1683
        %1712 = vmatprep.subr.bf16.mxu0 0
        %1713 = vmatpush1.bf16.msra.mxu0 %v1682
        %1714 = vmatprep.subr.bf16.mxu0 0
        %1715 = vmatpush2.bf16.msra.mxu0 0
        %1716 = vmatprep.subr.bf16.mxu0 0
        %1717 = vmatpush2.bf16.msra.mxu0 0
        %1718 = vmatprep.subr.bf16.mxu0 0
        %1719 = vmatpush2.bf16.msra.mxu0 0
        %1720 = vmatprep.subr.bf16.mxu0 0
        %1721 = vmatpush2.bf16.msra.mxu0 0
        %1722 = vmatprep.subr.bf16.mxu0 0
        %1723 = vmatpush2.bf16.msra.mxu0 0
        %1724 = vmatprep.subr.bf16.mxu0 0
        %1725 = vmatpush2.bf16.msra.mxu0 0
        %1726 = vmatprep.subr.bf16.mxu0 0
        %1727 = vmatpush2.bf16.msra.mxu0 0
        %1728 = vmatprep.subr.bf16.mxu0 0
        %1729 = vmatpush2.bf16.msra.mxu0 0
        %1730 = vmatprep.mubr.bf16.mxu0 0
        %1731 = vmatmul.mubr.bf16.gmra.mxu0 %v1629
        %v1732 = vpop.f32.mrf.mxu0
        %v1733 = vadd.f32 %v1649, %v1732
        %v1734 = vpop.f32.mrf.mxu0
        %v1735 = vpop.f32.mrf.mxu0
        %v1736 = vpop.f32.mrf.mxu0
        %1737 = vdwg.mxu0
        %v1738 = vadd.f32 %v1019, %v1733
        %1739 = vadd.xlane.f32.xlu0 %v1738
        %v1740 = vpop.xlane.xlu0 %1739
        %v1741 = vrcp.pop 128.0
        %v1742 = vmul.f32 %v1740, %v1741
        %v1743 = vsub.f32 %v1738, %v1742
        %v1744 = vmul.f32 %v1743, %v1743
        %1745 = vadd.xlane.f32.xlu0 %v1744
        %v1746 = vpop.xlane.xlu0 %1745
        %v1747 = vmul.f32 %v1746, %v1741
        %v1748 = vadd.f32 %v1747, 1e-05
        %v1749 = vrsqrt.pop %v1748
        %v1750 = vmul.f32 %v1743, %v1749
        %v1751 = vlaneseq
        %v1752 = vshrl.u32 %v1751, 7
        %v1753 = vsub.s32 0, %v1752
        %v1754 = vrot.slane %v816, %v1753
        %v1755 = vmul.f32 %v1750, %v1754
        %v1756 = vlaneseq
        %v1757 = vshrl.u32 %v1756, 7
        %v1758 = vsub.s32 0, %v1757
        %v1759 = vrot.slane %v817, %v1758
        %v1760 = vadd.f32 %v1755, %v1759
        %v1761 = vpack.c.bf16 %v1760, %v1760
        %v1762 = vld [vmem:[#allocation20] sm:$0xff]
        %v1763 = vld [vmem:[#allocation20 + $0x8] sm:$0xff]
        %v1764 = vld [vmem:[#allocation20 + $0x10] sm:$0xff]
        %v1765 = vld [vmem:[#allocation20 + $0x18] sm:$0xff]
        %v1766 = vld [vmem:[#allocation20 + $0x20] sm:$0xff]
        %v1767 = vld [vmem:[#allocation20 + $0x28] sm:$0xff]
        %v1768 = vld [vmem:[#allocation20 + $0x30] sm:$0xff]
        %v1769 = vld [vmem:[#allocation20 + $0x38] sm:$0xff]
        %v1770 = vld [vmem:[#allocation20 + $0x40] sm:$0xff]
        %v1771 = vld [vmem:[#allocation20 + $0x48] sm:$0xff]
        %v1772 = vld [vmem:[#allocation20 + $0x50] sm:$0xff]
        %v1773 = vld [vmem:[#allocation20 + $0x58] sm:$0xff]
        %v1774 = vld [vmem:[#allocation20 + $0x60] sm:$0xff]
        %v1775 = vld [vmem:[#allocation20 + $0x68] sm:$0xff]
        %v1776 = vld [vmem:[#allocation20 + $0x70] sm:$0xff]
        %v1777 = vld [vmem:[#allocation20 + $0x78] sm:$0xff]
        %v1778 = vld [vmem:[#allocation20 + $0x80] sm:$0xff]
        %v1779 = vld [vmem:[#allocation20 + $0x88] sm:$0xff]
        %v1780 = vld [vmem:[#allocation20 + $0x90] sm:$0xff]
        %v1781 = vld [vmem:[#allocation20 + $0x98] sm:$0xff]
        %v1782 = vld [vmem:[#allocation20 + $0xa0] sm:$0xff]
        %v1783 = vld [vmem:[#allocation20 + $0xa8] sm:$0xff]
        %v1784 = vld [vmem:[#allocation20 + $0xb0] sm:$0xff]
        %v1785 = vld [vmem:[#allocation20 + $0xb8] sm:$0xff]
        %v1786 = vld [vmem:[#allocation20 + $0xc0] sm:$0xff]
        %v1787 = vld [vmem:[#allocation20 + $0xc8] sm:$0xff]
        %v1788 = vld [vmem:[#allocation20 + $0xd0] sm:$0xff]
        %v1789 = vld [vmem:[#allocation20 + $0xd8] sm:$0xff]
        %v1790 = vld [vmem:[#allocation20 + $0xe0] sm:$0xff]
        %v1791 = vld [vmem:[#allocation20 + $0xe8] sm:$0xff]
        %v1792 = vld [vmem:[#allocation20 + $0xf0] sm:$0xff]
        %v1793 = vld [vmem:[#allocation20 + $0xf8] sm:$0xff]
        %v1794 = vld [vmem:[%s13] sm:$0xf]
        %v1796 = vlaneseq
        %v1797 = vshrl.u32 %v1796, 7
        %v1798 = vsub.s32 0, %v1797
        %v1799 = vrot.slane %v1794, %v1798
        %v1800 = vlaneseq
        %v1801 = vshrl.u32 %v1800, 7
        %v1802 = vsub.s32 1, %v1801
        %v1803 = vrot.slane %v1794, %v1802
        %v1804 = vlaneseq
        %v1805 = vshrl.u32 %v1804, 7
        %v1806 = vsub.s32 2, %v1805
        %v1807 = vrot.slane %v1794, %v1806
        %v1808 = vlaneseq
        %v1809 = vshrl.u32 %v1808, 7
        %v1810 = vsub.s32 3, %v1809
        %v1811 = vrot.slane %v1794, %v1810
        %v1848 = vunpack.c.l.b16 %v1762
        %v1849 = vunpack.c.h.b16 %v1762
        %v1850 = vunpack.c.l.b16 %v1763
        %v1851 = vunpack.c.h.b16 %v1763
        %v1852 = vunpack.c.l.b16 %v1764
        %v1853 = vunpack.c.h.b16 %v1764
        %v1854 = vunpack.c.l.b16 %v1765
        %v1855 = vunpack.c.h.b16 %v1765
        %v1856 = vunpack.c.l.b16 %v1766
        %v1857 = vunpack.c.h.b16 %v1766
        %v1858 = vunpack.c.l.b16 %v1767
        %v1859 = vunpack.c.h.b16 %v1767
        %v1860 = vunpack.c.l.b16 %v1768
        %v1861 = vunpack.c.h.b16 %v1768
        %v1862 = vunpack.c.l.b16 %v1769
        %v1863 = vunpack.c.h.b16 %v1769
        %v1864 = vunpack.c.l.b16 %v1770
        %v1865 = vunpack.c.h.b16 %v1770
        %v1866 = vunpack.c.l.b16 %v1771
        %v1867 = vunpack.c.h.b16 %v1771
        %v1868 = vunpack.c.l.b16 %v1772
        %v1869 = vunpack.c.h.b16 %v1772
        %v1870 = vunpack.c.l.b16 %v1773
        %v1871 = vunpack.c.h.b16 %v1773
        %v1872 = vunpack.c.l.b16 %v1774
        %v1873 = vunpack.c.h.b16 %v1774
        %v1874 = vunpack.c.l.b16 %v1775
        %v1875 = vunpack.c.h.b16 %v1775
        %v1876 = vunpack.c.l.b16 %v1776
        %v1877 = vunpack.c.h.b16 %v1776
        %v1878 = vunpack.c.l.b16 %v1777
        %v1879 = vunpack.c.h.b16 %v1777
        %v1880 = vunpack.c.l.b16 %v1778
        %v1881 = vunpack.c.h.b16 %v1778
        %v1882 = vunpack.c.l.b16 %v1779
        %v1883 = vunpack.c.h.b16 %v1779
        %v1884 = vunpack.c.l.b16 %v1780
        %v1885 = vunpack.c.h.b16 %v1780
        %v1886 = vunpack.c.l.b16 %v1781
        %v1887 = vunpack.c.h.b16 %v1781
        %v1888 = vunpack.c.l.b16 %v1782
        %v1889 = vunpack.c.h.b16 %v1782
        %v1890 = vunpack.c.l.b16 %v1783
        %v1891 = vunpack.c.h.b16 %v1783
        %v1892 = vunpack.c.l.b16 %v1784
        %v1893 = vunpack.c.h.b16 %v1784
        %v1894 = vunpack.c.l.b16 %v1785
        %v1895 = vunpack.c.h.b16 %v1785
        %v1896 = vunpack.c.l.b16 %v1786
        %v1897 = vunpack.c.h.b16 %v1786
        %v1898 = vunpack.c.l.b16 %v1787
        %v1899 = vunpack.c.h.b16 %v1787
        %v1900 = vunpack.c.l.b16 %v1788
        %v1901 = vunpack.c.h.b16 %v1788
        %v1902 = vunpack.c.l.b16 %v1789
        %v1903 = vunpack.c.h.b16 %v1789
        %v1904 = vunpack.c.l.b16 %v1790
        %v1905 = vunpack.c.h.b16 %v1790
        %v1906 = vunpack.c.l.b16 %v1791
        %v1907 = vunpack.c.h.b16 %v1791
        %v1908 = vunpack.c.l.b16 %v1792
        %v1909 = vunpack.c.h.b16 %v1792
        %v1910 = vunpack.c.l.b16 %v1793
        %v1911 = vunpack.c.h.b16 %v1793
        %v1912 = vpack.c.b16 %v1852, %v1848
        %v1913 = vpack.c.b16 %v1853, %v1849
        %v1914 = vpack.c.b16 %v1854, %v1850
        %v1915 = vpack.c.b16 %v1855, %v1851
        %v1916 = vpack.c.b16 %v1860, %v1856
        %v1917 = vpack.c.b16 %v1861, %v1857
        %v1918 = vpack.c.b16 %v1862, %v1858
        %v1919 = vpack.c.b16 %v1863, %v1859
        %v1920 = vpack.c.b16 %v1868, %v1864
        %v1921 = vpack.c.b16 %v1869, %v1865
        %v1922 = vpack.c.b16 %v1870, %v1866
        %v1923 = vpack.c.b16 %v1871, %v1867
        %v1924 = vpack.c.b16 %v1876, %v1872
        %v1925 = vpack.c.b16 %v1877, %v1873
        %v1926 = vpack.c.b16 %v1878, %v1874
        %v1927 = vpack.c.b16 %v1879, %v1875
        %v1928 = vpack.c.b16 %v1884, %v1880
        %v1929 = vpack.c.b16 %v1885, %v1881
        %v1930 = vpack.c.b16 %v1886, %v1882
        %v1931 = vpack.c.b16 %v1887, %v1883
        %v1932 = vpack.c.b16 %v1892, %v1888
        %v1933 = vpack.c.b16 %v1893, %v1889
        %v1934 = vpack.c.b16 %v1894, %v1890
        %v1935 = vpack.c.b16 %v1895, %v1891
        %v1936 = vpack.c.b16 %v1900, %v1896
        %v1937 = vpack.c.b16 %v1901, %v1897
        %v1938 = vpack.c.b16 %v1902, %v1898
        %v1939 = vpack.c.b16 %v1903, %v1899
        %v1940 = vpack.c.b16 %v1908, %v1904
        %v1941 = vpack.c.b16 %v1909, %v1905
        %v1942 = vpack.c.b16 %v1910, %v1906
        %v1943 = vpack.c.b16 %v1911, %v1907
        %1976 = vmatprep.subr.bf16.mxu0 %v1941
        %1977 = vmatpush1.bf16.msra.mxu0 %v1940
        %1978 = vmatprep.subr.bf16.mxu0 %v1937
        %1979 = vmatpush1.bf16.msra.mxu0 %v1936
        %1980 = vmatprep.subr.bf16.mxu0 %v1933
        %1981 = vmatpush1.bf16.msra.mxu0 %v1932
        %1982 = vmatprep.subr.bf16.mxu0 %v1929
        %1983 = vmatpush1.bf16.msra.mxu0 %v1928
        %1984 = vmatprep.subr.bf16.mxu0 %v1925
        %1985 = vmatpush1.bf16.msra.mxu0 %v1924
        %1986 = vmatprep.subr.bf16.mxu0 %v1921
        %1987 = vmatpush1.bf16.msra.mxu0 %v1920
        %1988 = vmatprep.subr.bf16.mxu0 %v1917
        %1989 = vmatpush1.bf16.msra.mxu0 %v1916
        %1990 = vmatprep.subr.bf16.mxu0 %v1913
        %1991 = vmatpush1.bf16.msra.mxu0 %v1912
        %1992 = vmatprep.subr.bf16.mxu0 0
        %1993 = vmatpush2.bf16.msra.mxu0 0
        %1994 = vmatprep.subr.bf16.mxu0 0
        %1995 = vmatpush2.bf16.msra.mxu0 0
        %1996 = vmatprep.subr.bf16.mxu0 0
        %1997 = vmatpush2.bf16.msra.mxu0 0
        %1998 = vmatprep.subr.bf16.mxu0 0
        %1999 = vmatpush2.bf16.msra.mxu0 0
        %2000 = vmatprep.subr.bf16.mxu0 0
        %2001 = vmatpush2.bf16.msra.mxu0 0
        %2002 = vmatprep.subr.bf16.mxu0 0
        %2003 = vmatpush2.bf16.msra.mxu0 0
        %2004 = vmatprep.subr.bf16.mxu0 0
        %2005 = vmatpush2.bf16.msra.mxu0 0
        %2006 = vmatprep.subr.bf16.mxu0 0
        %2007 = vmatpush2.bf16.msra.mxu0 0
        %2008 = vmatprep.mubr.bf16.mxu0 0
        %2009 = vmatmul.mubr.bf16.gmra.mxu0 %v1761
        %v2010 = vpop.f32.mrf.mxu0
        %v2011 = vadd.f32 %v1799, %v2010
        %v2012 = vpop.f32.mrf.mxu0
        %v2013 = vadd.f32 %v1803, %v2012
        %v2014 = vpop.f32.mrf.mxu0
        %v2015 = vpop.f32.mrf.mxu0
        %2016 = vdwg.mxu0
        %2017 = vmatprep.subr.bf16.mxu0 %v1943
        %2018 = vmatpush1.bf16.msra.mxu0 %v1942
        %2019 = vmatprep.subr.bf16.mxu0 %v1939
        %2020 = vmatpush1.bf16.msra.mxu0 %v1938
        %2021 = vmatprep.subr.bf16.mxu0 %v1935
        %2022 = vmatpush1.bf16.msra.mxu0 %v1934
        %2023 = vmatprep.subr.bf16.mxu0 %v1931
        %2024 = vmatpush1.bf16.msra.mxu0 %v1930
        %2025 = vmatprep.subr.bf16.mxu0 %v1927
        %2026 = vmatpush1.bf16.msra.mxu0 %v1926
        %2027 = vmatprep.subr.bf16.mxu0 %v1923
        %2028 = vmatpush1.bf16.msra.mxu0 %v1922
        %2029 = vmatprep.subr.bf16.mxu0 %v1919
        %2030 = vmatpush1.bf16.msra.mxu0 %v1918
        %2031 = vmatprep.subr.bf16.mxu0 %v1915
        %2032 = vmatpush1.bf16.msra.mxu0 %v1914
        %2033 = vmatprep.subr.bf16.mxu0 0
        %2034 = vmatpush2.bf16.msra.mxu0 0
        %2035 = vmatprep.subr.bf16.mxu0 0
        %2036 = vmatpush2.bf16.msra.mxu0 0
        %2037 = vmatprep.subr.bf16.mxu0 0
        %2038 = vmatpush2.bf16.msra.mxu0 0
        %2039 = vmatprep.subr.bf16.mxu0 0
        %2040 = vmatpush2.bf16.msra.mxu0 0
        %2041 = vmatprep.subr.bf16.mxu0 0
        %2042 = vmatpush2.bf16.msra.mxu0 0
        %2043 = vmatprep.subr.bf16.mxu0 0
        %2044 = vmatpush2.bf16.msra.mxu0 0
        %2045 = vmatprep.subr.bf16.mxu0 0
        %2046 = vmatpush2.bf16.msra.mxu0 0
        %2047 = vmatprep.subr.bf16.mxu0 0
        %2048 = vmatpush2.bf16.msra.mxu0 0
        %2049 = vmatprep.mubr.bf16.mxu0 0
        %2050 = vmatmul.mubr.bf16.gmra.mxu0 %v1761
        %v2051 = vpop.f32.mrf.mxu0
        %v2052 = vadd.f32 %v1807, %v2051
        %v2053 = vpop.f32.mrf.mxu0
        %v2054 = vadd.f32 %v1811, %v2053
        %v2055 = vpop.f32.mrf.mxu0
        %v2056 = vpop.f32.mrf.mxu0
        %2057 = vdwg.mxu0
        %v2058 = vmul.f32 %v2011, 0.5
        %v2059 = vmul.f32 %v2013, 0.5
        %v2060 = vmul.f32 %v2052, 0.5
        %v2061 = vmul.f32 %v2054, 0.5
        %v2062 = vmul.f32 %v2011, 0.70710677
        %v2063 = vmul.f32 %v2013, 0.70710677
        %v2064 = vmul.f32 %v2052, 0.70710677
        %v2065 = vmul.f32 %v2054, 0.70710677
        %v2066 = verf.f32.pop %v2062
        %v2067 = verf.f32.pop %v2063
        %v2068 = verf.f32.pop %v2064
        %v2069 = verf.f32.pop %v2065
        %v2070 = vadd.f32 %v2066, 1.0
        %v2071 = vadd.f32 %v2067, 1.0
        %v2072 = vadd.f32 %v2068, 1.0
        %v2073 = vadd.f32 %v2069, 1.0
        %v2074 = vmul.f32 %v2058, %v2070
        %v2075 = vmul.f32 %v2059, %v2071
        %v2076 = vmul.f32 %v2060, %v2072
        %v2077 = vmul.f32 %v2061, %v2073
        %v2078 = vpack.c.bf16 %v2074, %v2074
        %v2079 = vpack.c.bf16 %v2075, %v2075
        %v2080 = vpack.c.bf16 %v2076, %v2076
        %v2081 = vpack.c.bf16 %v2077, %v2077
        %v2082 = vld [vmem:[#allocation22] sm:$0xf]
        %v2083 = vld [vmem:[#allocation22 + $0x4] sm:$0xf]
        %v2084 = vld [vmem:[#allocation22 + $0x8] sm:$0xf]
        %v2085 = vld [vmem:[#allocation22 + $0xc] sm:$0xf]
        %v2086 = vld [vmem:[#allocation22 + $0x10] sm:$0xf]
        %v2087 = vld [vmem:[#allocation22 + $0x14] sm:$0xf]
        %v2088 = vld [vmem:[#allocation22 + $0x18] sm:$0xf]
        %v2089 = vld [vmem:[#allocation22 + $0x1c] sm:$0xf]
        %v2090 = vld [vmem:[#allocation22 + $0x20] sm:$0xf]
        %v2091 = vld [vmem:[#allocation22 + $0x24] sm:$0xf]
        %v2092 = vld [vmem:[#allocation22 + $0x28] sm:$0xf]
        %v2093 = vld [vmem:[#allocation22 + $0x2c] sm:$0xf]
        %v2094 = vld [vmem:[#allocation22 + $0x30] sm:$0xf]
        %v2095 = vld [vmem:[#allocation22 + $0x34] sm:$0xf]
        %v2096 = vld [vmem:[#allocation22 + $0x38] sm:$0xf]
        %v2097 = vld [vmem:[#allocation22 + $0x3c] sm:$0xf]
        %v2098 = vld [vmem:[#allocation22 + $0x40] sm:$0xf]
        %v2099 = vld [vmem:[#allocation22 + $0x44] sm:$0xf]
        %v2100 = vld [vmem:[#allocation22 + $0x48] sm:$0xf]
        %v2101 = vld [vmem:[#allocation22 + $0x4c] sm:$0xf]
        %v2102 = vld [vmem:[#allocation22 + $0x50] sm:$0xf]
        %v2103 = vld [vmem:[#allocation22 + $0x54] sm:$0xf]
        %v2104 = vld [vmem:[#allocation22 + $0x58] sm:$0xf]
        %v2105 = vld [vmem:[#allocation22 + $0x5c] sm:$0xf]
        %v2106 = vld [vmem:[#allocation22 + $0x60] sm:$0xf]
        %v2107 = vld [vmem:[#allocation22 + $0x64] sm:$0xf]
        %v2108 = vld [vmem:[#allocation22 + $0x68] sm:$0xf]
        %v2109 = vld [vmem:[#allocation22 + $0x6c] sm:$0xf]
        %v2110 = vld [vmem:[#allocation22 + $0x70] sm:$0xf]
        %v2111 = vld [vmem:[#allocation22 + $0x74] sm:$0xf]
        %v2112 = vld [vmem:[#allocation22 + $0x78] sm:$0xf]
        %v2113 = vld [vmem:[#allocation22 + $0x7c] sm:$0xf]
        %v2114 = vld [vmem:[#allocation22 + $0x80] sm:$0xf]
        %v2115 = vld [vmem:[#allocation22 + $0x84] sm:$0xf]
        %v2116 = vld [vmem:[#allocation22 + $0x88] sm:$0xf]
        %v2117 = vld [vmem:[#allocation22 + $0x8c] sm:$0xf]
        %v2118 = vld [vmem:[#allocation22 + $0x90] sm:$0xf]
        %v2119 = vld [vmem:[#allocation22 + $0x94] sm:$0xf]
        %v2120 = vld [vmem:[#allocation22 + $0x98] sm:$0xf]
        %v2121 = vld [vmem:[#allocation22 + $0x9c] sm:$0xf]
        %v2122 = vld [vmem:[#allocation22 + $0xa0] sm:$0xf]
        %v2123 = vld [vmem:[#allocation22 + $0xa4] sm:$0xf]
        %v2124 = vld [vmem:[#allocation22 + $0xa8] sm:$0xf]
        %v2125 = vld [vmem:[#allocation22 + $0xac] sm:$0xf]
        %v2126 = vld [vmem:[#allocation22 + $0xb0] sm:$0xf]
        %v2127 = vld [vmem:[#allocation22 + $0xb4] sm:$0xf]
        %v2128 = vld [vmem:[#allocation22 + $0xb8] sm:$0xf]
        %v2129 = vld [vmem:[#allocation22 + $0xbc] sm:$0xf]
        %v2130 = vld [vmem:[#allocation22 + $0xc0] sm:$0xf]
        %v2131 = vld [vmem:[#allocation22 + $0xc4] sm:$0xf]
        %v2132 = vld [vmem:[#allocation22 + $0xc8] sm:$0xf]
        %v2133 = vld [vmem:[#allocation22 + $0xcc] sm:$0xf]
        %v2134 = vld [vmem:[#allocation22 + $0xd0] sm:$0xf]
        %v2135 = vld [vmem:[#allocation22 + $0xd4] sm:$0xf]
        %v2136 = vld [vmem:[#allocation22 + $0xd8] sm:$0xf]
        %v2137 = vld [vmem:[#allocation22 + $0xdc] sm:$0xf]
        %v2138 = vld [vmem:[#allocation22 + $0xe0] sm:$0xf]
        %v2139 = vld [vmem:[#allocation22 + $0xe4] sm:$0xf]
        %v2140 = vld [vmem:[#allocation22 + $0xe8] sm:$0xf]
        %v2141 = vld [vmem:[#allocation22 + $0xec] sm:$0xf]
        %v2142 = vld [vmem:[#allocation22 + $0xf0] sm:$0xf]
        %v2143 = vld [vmem:[#allocation22 + $0xf4] sm:$0xf]
        %v2144 = vld [vmem:[#allocation22 + $0xf8] sm:$0xf]
        %v2145 = vld [vmem:[#allocation22 + $0xfc] sm:$0xf]
        %v2146 = vlaneseq
        %v2147 = vshrl.u32 %v2146, 7
        %v2148 = vsub.s32 0, %v2147
        %v2149 = vrot.slane %v815, %v2148
        %v2214 = vunpack.c.l.b16 %v2082
        %v2215 = vunpack.c.l.b16 %v2083
        %v2216 = vunpack.c.l.b16 %v2084
        %v2217 = vunpack.c.l.b16 %v2085
        %v2218 = vunpack.c.l.b16 %v2086
        %v2219 = vunpack.c.l.b16 %v2087
        %v2220 = vunpack.c.l.b16 %v2088
        %v2221 = vunpack.c.l.b16 %v2089
        %v2222 = vunpack.c.l.b16 %v2090
        %v2223 = vunpack.c.l.b16 %v2091
        %v2224 = vunpack.c.l.b16 %v2092
        %v2225 = vunpack.c.l.b16 %v2093
        %v2226 = vunpack.c.l.b16 %v2094
        %v2227 = vunpack.c.l.b16 %v2095
        %v2228 = vunpack.c.l.b16 %v2096
        %v2229 = vunpack.c.l.b16 %v2097
        %v2230 = vunpack.c.l.b16 %v2098
        %v2231 = vunpack.c.l.b16 %v2099
        %v2232 = vunpack.c.l.b16 %v2100
        %v2233 = vunpack.c.l.b16 %v2101
        %v2234 = vunpack.c.l.b16 %v2102
        %v2235 = vunpack.c.l.b16 %v2103
        %v2236 = vunpack.c.l.b16 %v2104
        %v2237 = vunpack.c.l.b16 %v2105
        %v2238 = vunpack.c.l.b16 %v2106
        %v2239 = vunpack.c.l.b16 %v2107
        %v2240 = vunpack.c.l.b16 %v2108
        %v2241 = vunpack.c.l.b16 %v2109
        %v2242 = vunpack.c.l.b16 %v2110
        %v2243 = vunpack.c.l.b16 %v2111
        %v2244 = vunpack.c.l.b16 %v2112
        %v2245 = vunpack.c.l.b16 %v2113
        %v2246 = vunpack.c.l.b16 %v2114
        %v2247 = vunpack.c.l.b16 %v2115
        %v2248 = vunpack.c.l.b16 %v2116
        %v2249 = vunpack.c.l.b16 %v2117
        %v2250 = vunpack.c.l.b16 %v2118
        %v2251 = vunpack.c.l.b16 %v2119
        %v2252 = vunpack.c.l.b16 %v2120
        %v2253 = vunpack.c.l.b16 %v2121
        %v2254 = vunpack.c.l.b16 %v2122
        %v2255 = vunpack.c.l.b16 %v2123
        %v2256 = vunpack.c.l.b16 %v2124
        %v2257 = vunpack.c.l.b16 %v2125
        %v2258 = vunpack.c.l.b16 %v2126
        %v2259 = vunpack.c.l.b16 %v2127
        %v2260 = vunpack.c.l.b16 %v2128
        %v2261 = vunpack.c.l.b16 %v2129
        %v2262 = vunpack.c.l.b16 %v2130
        %v2263 = vunpack.c.l.b16 %v2131
        %v2264 = vunpack.c.l.b16 %v2132
        %v2265 = vunpack.c.l.b16 %v2133
        %v2266 = vunpack.c.l.b16 %v2134
        %v2267 = vunpack.c.l.b16 %v2135
        %v2268 = vunpack.c.l.b16 %v2136
        %v2269 = vunpack.c.l.b16 %v2137
        %v2270 = vunpack.c.l.b16 %v2138
        %v2271 = vunpack.c.l.b16 %v2139
        %v2272 = vunpack.c.l.b16 %v2140
        %v2273 = vunpack.c.l.b16 %v2141
        %v2274 = vunpack.c.l.b16 %v2142
        %v2275 = vunpack.c.l.b16 %v2143
        %v2276 = vunpack.c.l.b16 %v2144
        %v2277 = vunpack.c.l.b16 %v2145
        %v2278 = vpack.c.b16 %v2215, %v2214
        %v2279 = vpack.c.b16 %v2217, %v2216
        %v2280 = vpack.c.b16 %v2219, %v2218
        %v2281 = vpack.c.b16 %v2221, %v2220
        %v2282 = vpack.c.b16 %v2223, %v2222
        %v2283 = vpack.c.b16 %v2225, %v2224
        %v2284 = vpack.c.b16 %v2227, %v2226
        %v2285 = vpack.c.b16 %v2229, %v2228
        %v2286 = vpack.c.b16 %v2231, %v2230
        %v2287 = vpack.c.b16 %v2233, %v2232
        %v2288 = vpack.c.b16 %v2235, %v2234
        %v2289 = vpack.c.b16 %v2237, %v2236
        %v2290 = vpack.c.b16 %v2239, %v2238
        %v2291 = vpack.c.b16 %v2241, %v2240
        %v2292 = vpack.c.b16 %v2243, %v2242
        %v2293 = vpack.c.b16 %v2245, %v2244
        %v2294 = vpack.c.b16 %v2247, %v2246
        %v2295 = vpack.c.b16 %v2249, %v2248
        %v2296 = vpack.c.b16 %v2251, %v2250
        %v2297 = vpack.c.b16 %v2253, %v2252
        %v2298 = vpack.c.b16 %v2255, %v2254
        %v2299 = vpack.c.b16 %v2257, %v2256
        %v2300 = vpack.c.b16 %v2259, %v2258
        %v2301 = vpack.c.b16 %v2261, %v2260
        %v2302 = vpack.c.b16 %v2263, %v2262
        %v2303 = vpack.c.b16 %v2265, %v2264
        %v2304 = vpack.c.b16 %v2267, %v2266
        %v2305 = vpack.c.b16 %v2269, %v2268
        %v2306 = vpack.c.b16 %v2271, %v2270
        %v2307 = vpack.c.b16 %v2273, %v2272
        %v2308 = vpack.c.b16 %v2275, %v2274
        %v2309 = vpack.c.b16 %v2277, %v2276
        %2342 = vmatprep.subr.bf16.mxu0 0
        %2343 = vmatpush1.bf16.msra.mxu0 %v2285
        %2344 = vmatprep.subr.bf16.mxu0 0
        %2345 = vmatpush1.bf16.msra.mxu0 %v2284
        %2346 = vmatprep.subr.bf16.mxu0 0
        %2347 = vmatpush1.bf16.msra.mxu0 %v2283
        %2348 = vmatprep.subr.bf16.mxu0 0
        %2349 = vmatpush1.bf16.msra.mxu0 %v2282
        %2350 = vmatprep.subr.bf16.mxu0 0
        %2351 = vmatpush1.bf16.msra.mxu0 %v2281
        %2352 = vmatprep.subr.bf16.mxu0 0
        %2353 = vmatpush1.bf16.msra.mxu0 %v2280
        %2354 = vmatprep.subr.bf16.mxu0 0
        %2355 = vmatpush1.bf16.msra.mxu0 %v2279
        %2356 = vmatprep.subr.bf16.mxu0 0
        %2357 = vmatpush1.bf16.msra.mxu0 %v2278
        %2358 = vmatprep.subr.bf16.mxu0 0
        %2359 = vmatpush2.bf16.msra.mxu0 %v2293
        %2360 = vmatprep.subr.bf16.mxu0 0
        %2361 = vmatpush2.bf16.msra.mxu0 %v2292
        %2362 = vmatprep.subr.bf16.mxu0 0
        %2363 = vmatpush2.bf16.msra.mxu0 %v2291
        %2364 = vmatprep.subr.bf16.mxu0 0
        %2365 = vmatpush2.bf16.msra.mxu0 %v2290
        %2366 = vmatprep.subr.bf16.mxu0 0
        %2367 = vmatpush2.bf16.msra.mxu0 %v2289
        %2368 = vmatprep.subr.bf16.mxu0 0
        %2369 = vmatpush2.bf16.msra.mxu0 %v2288
        %2370 = vmatprep.subr.bf16.mxu0 0
        %2371 = vmatpush2.bf16.msra.mxu0 %v2287
        %2372 = vmatprep.subr.bf16.mxu0 0
        %2373 = vmatpush2.bf16.msra.mxu0 %v2286
        %2374 = vmatprep.mubr.bf16.mxu0 %v2079
        %2375 = vmatmul.mubr.bf16.gmra.mxu0 %v2078
        %v2376 = vpop.f32.mrf.mxu0
        %v2377 = vadd.f32 %v2149, %v2376
        %v2378 = vpop.f32.mrf.mxu0
        %v2379 = vpop.f32.mrf.mxu0
        %v2380 = vpop.f32.mrf.mxu0
        %2381 = vdwg.mxu0
        %2382 = vmatprep.subr.bf16.mxu0 0
        %2383 = vmatpush1.bf16.msra.mxu0 %v2301
        %2384 = vmatprep.subr.bf16.mxu0 0
        %2385 = vmatpush1.bf16.msra.mxu0 %v2300
        %2386 = vmatprep.subr.bf16.mxu0 0
        %2387 = vmatpush1.bf16.msra.mxu0 %v2299
        %2388 = vmatprep.subr.bf16.mxu0 0
        %2389 = vmatpush1.bf16.msra.mxu0 %v2298
        %2390 = vmatprep.subr.bf16.mxu0 0
        %2391 = vmatpush1.bf16.msra.mxu0 %v2297
        %2392 = vmatprep.subr.bf16.mxu0 0
        %2393 = vmatpush1.bf16.msra.mxu0 %v2296
        %2394 = vmatprep.subr.bf16.mxu0 0
        %2395 = vmatpush1.bf16.msra.mxu0 %v2295
        %2396 = vmatprep.subr.bf16.mxu0 0
        %2397 = vmatpush1.bf16.msra.mxu0 %v2294
        %2398 = vmatprep.subr.bf16.mxu0 0
        %2399 = vmatpush2.bf16.msra.mxu0 %v2309
        %2400 = vmatprep.subr.bf16.mxu0 0
        %2401 = vmatpush2.bf16.msra.mxu0 %v2308
        %2402 = vmatprep.subr.bf16.mxu0 0
        %2403 = vmatpush2.bf16.msra.mxu0 %v2307
        %2404 = vmatprep.subr.bf16.mxu0 0
        %2405 = vmatpush2.bf16.msra.mxu0 %v2306
        %2406 = vmatprep.subr.bf16.mxu0 0
        %2407 = vmatpush2.bf16.msra.mxu0 %v2305
        %2408 = vmatprep.subr.bf16.mxu0 0
        %2409 = vmatpush2.bf16.msra.mxu0 %v2304
        %2410 = vmatprep.subr.bf16.mxu0 0
        %2411 = vmatpush2.bf16.msra.mxu0 %v2303
        %2412 = vmatprep.subr.bf16.mxu0 0
        %2413 = vmatpush2.bf16.msra.mxu0 %v2302
        %2414 = vmatprep.mubr.bf16.mxu0 %v2081
        %2415 = vmatmul.mubr.bf16.gmra.mxu0 %v2080
        %v2416 = vpop.f32.mrf.mxu0
        %v2417 = vadd.f32 %v2377, %v2416
        %v2418 = vpop.f32.mrf.mxu0
        %v2419 = vpop.f32.mrf.mxu0
        %v2420 = vpop.f32.mrf.mxu0
        %2421 = vdwg.mxu0
        %v2422 = vadd.f32 %v1760, %v2417
        %2423 = vadd.xlane.f32.xlu0 %v2422
        %v2424 = vpop.xlane.xlu0 %2423
        %v2425 = vmul.f32 %v2424, %v1741
        %v2426 = vsub.f32 %v2422, %v2425
        %v2427 = vmul.f32 %v2426, %v2426
        %2428 = vadd.xlane.f32.xlu0 %v2427
        %v2429 = vpop.xlane.xlu0 %2428
        %v2430 = vmul.f32 %v2429, %v1741
        %v2431 = vadd.f32 %v2430, 1e-05
        %v2432 = vrsqrt.pop %v2431
        %v2433 = vmul.f32 %v2426, %v2432
        %v2434 = vlaneseq
        %v2435 = vshrl.u32 %v2434, 7
        %v2436 = vsub.s32 0, %v2435
        %v2437 = vrot.slane %v818, %v2436
        %v2438 = vmul.f32 %v2433, %v2437
        %v2439 = vlaneseq
        %v2440 = vshrl.u32 %v2439, 7
        %v2441 = vsub.s32 0, %v2440
        %v2442 = vrot.slane %v819, %v2441
        %v2443 = vadd.f32 %v2438, %v2442
        %v2444 = vpack.c.bf16 %v2443, %v2443
        %v2445 = vld [vmem:[#allocation23] sm:$0xff]
        %v2446 = vld [vmem:[#allocation23 + $0x8] sm:$0xff]
        %v2447 = vld [vmem:[#allocation23 + $0x10] sm:$0xff]
        %v2448 = vld [vmem:[#allocation23 + $0x18] sm:$0xff]
        %v2449 = vld [vmem:[#allocation23 + $0x20] sm:$0xff]
        %v2450 = vld [vmem:[#allocation23 + $0x28] sm:$0xff]
        %v2451 = vld [vmem:[#allocation23 + $0x30] sm:$0xff]
        %v2452 = vld [vmem:[#allocation23 + $0x38] sm:$0xff]
        %v2453 = vld [vmem:[#allocation23 + $0x40] sm:$0xff]
        %v2454 = vld [vmem:[#allocation23 + $0x48] sm:$0xff]
        %v2455 = vld [vmem:[#allocation23 + $0x50] sm:$0xff]
        %v2456 = vld [vmem:[#allocation23 + $0x58] sm:$0xff]
        %v2457 = vld [vmem:[#allocation23 + $0x60] sm:$0xff]
        %v2458 = vld [vmem:[#allocation23 + $0x68] sm:$0xff]
        %v2459 = vld [vmem:[#allocation23 + $0x70] sm:$0xff]
        %v2460 = vld [vmem:[#allocation23 + $0x78] sm:$0xff]
        %v2461 = vld [vmem:[%s16] sm:$0x3]
        %v2463 = vlaneseq
        %v2464 = vshrl.u32 %v2463, 7
        %v2465 = vsub.s32 0, %v2464
        %v2466 = vrot.slane %v2461, %v2465
        %v2467 = vlaneseq
        %v2468 = vshrl.u32 %v2467, 7
        %v2469 = vsub.s32 1, %v2468
        %v2470 = vrot.slane %v2461, %v2469
        %v2489 = vunpack.c.l.b16 %v2445
        %v2490 = vunpack.c.h.b16 %v2445
        %v2491 = vunpack.c.l.b16 %v2446
        %v2492 = vunpack.c.h.b16 %v2446
        %v2493 = vunpack.c.l.b16 %v2447
        %v2494 = vunpack.c.h.b16 %v2447
        %v2495 = vunpack.c.l.b16 %v2448
        %v2496 = vunpack.c.h.b16 %v2448
        %v2497 = vunpack.c.l.b16 %v2449
        %v2498 = vunpack.c.h.b16 %v2449
        %v2499 = vunpack.c.l.b16 %v2450
        %v2500 = vunpack.c.h.b16 %v2450
        %v2501 = vunpack.c.l.b16 %v2451
        %v2502 = vunpack.c.h.b16 %v2451
        %v2503 = vunpack.c.l.b16 %v2452
        %v2504 = vunpack.c.h.b16 %v2452
        %v2505 = vunpack.c.l.b16 %v2453
        %v2506 = vunpack.c.h.b16 %v2453
        %v2507 = vunpack.c.l.b16 %v2454
        %v2508 = vunpack.c.h.b16 %v2454
        %v2509 = vunpack.c.l.b16 %v2455
        %v2510 = vunpack.c.h.b16 %v2455
        %v2511 = vunpack.c.l.b16 %v2456
        %v2512 = vunpack.c.h.b16 %v2456
        %v2513 = vunpack.c.l.b16 %v2457
        %v2514 = vunpack.c.h.b16 %v2457
        %v2515 = vunpack.c.l.b16 %v2458
        %v2516 = vunpack.c.h.b16 %v2458
        %v2517 = vunpack.c.l.b16 %v2459
        %v2518 = vunpack.c.h.b16 %v2459
        %v2519 = vunpack.c.l.b16 %v2460
        %v2520 = vunpack.c.h.b16 %v2460
        %v2521 = vpack.c.b16 %v2491, %v2489
        %v2522 = vpack.c.b16 %v2492, %v2490
        %v2523 = vpack.c.b16 %v2495, %v2493
        %v2524 = vpack.c.b16 %v2496, %v2494
        %v2525 = vpack.c.b16 %v2499, %v2497
        %v2526 = vpack.c.b16 %v2500, %v2498
        %v2527 = vpack.c.b16 %v2503, %v2501
        %v2528 = vpack.c.b16 %v2504, %v2502
        %v2529 = vpack.c.b16 %v2507, %v2505
        %v2530 = vpack.c.b16 %v2508, %v2506
        %v2531 = vpack.c.b16 %v2511, %v2509
        %v2532 = vpack.c.b16 %v2512, %v2510
        %v2533 = vpack.c.b16 %v2515, %v2513
        %v2534 = vpack.c.b16 %v2516, %v2514
        %v2535 = vpack.c.b16 %v2519, %v2517
        %v2536 = vpack.c.b16 %v2520, %v2518
        %2553 = vmatprep.subr.bf16.mxu0 %v2536
        %2554 = vmatpush1.bf16.msra.mxu0 %v2535
        %2555 = vmatprep.subr.bf16.mxu0 %v2534
        %2556 = vmatpush1.bf16.msra.mxu0 %v2533
        %2557 = vmatprep.subr.bf16.mxu0 %v2532
        %2558 = vmatpush1.bf16.msra.mxu0 %v2531
        %2559 = vmatprep.subr.bf16.mxu0 %v2530
        %2560 = vmatpush1.bf16.msra.mxu0 %v2529
        %2561 = vmatprep.subr.bf16.mxu0 %v2528
        %2562 = vmatpush1.bf16.msra.mxu0 %v2527
        %2563 = vmatprep.subr.bf16.mxu0 %v2526
        %2564 = vmatpush1.bf16.msra.mxu0 %v2525
        %2565 = vmatprep.subr.bf16.mxu0 %v2524
        %2566 = vmatpush1.bf16.msra.mxu0 %v2523
        %2567 = vmatprep.subr.bf16.mxu0 %v2522
        %2568 = vmatpush1.bf16.msra.mxu0 %v2521
        %2569 = vmatprep.subr.bf16.mxu0 0
        %2570 = vmatpush2.bf16.msra.mxu0 0
        %2571 = vmatprep.subr.bf16.mxu0 0
        %2572 = vmatpush2.bf16.msra.mxu0 0
        %2573 = vmatprep.subr.bf16.mxu0 0
        %2574 = vmatpush2.bf16.msra.mxu0 0
        %2575 = vmatprep.subr.bf16.mxu0 0
        %2576 = vmatpush2.bf16.msra.mxu0 0
        %2577 = vmatprep.subr.bf16.mxu0 0
        %2578 = vmatpush2.bf16.msra.mxu0 0
        %2579 = vmatprep.subr.bf16.mxu0 0
        %2580 = vmatpush2.bf16.msra.mxu0 0
        %2581 = vmatprep.subr.bf16.mxu0 0
        %2582 = vmatpush2.bf16.msra.mxu0 0
        %2583 = vmatprep.subr.bf16.mxu0 0
        %2584 = vmatpush2.bf16.msra.mxu0 0
        %2585 = vmatprep.mubr.bf16.mxu0 0
        %2586 = vmatmul.mubr.bf16.gmra.mxu0 %v2444
        %v2587 = vpop.f32.mrf.mxu0
        %v2588 = vadd.f32 %v2466, %v2587
        %v2589 = vpop.f32.mrf.mxu0
        %v2590 = vadd.f32 %v2470, %v2589
        %v2591 = vpop.f32.mrf.mxu0
        %v2592 = vpop.f32.mrf.mxu0
        %2593 = vdwg.mxu0
        %2594 = vst [vmem:[%s811] sm:$0xff] %v2588
        %2595 = vst [vmem:[%s811 + $0x8] sm:$0xff] %v2590
        %s2596 = sand.u32 %s445, 1
        %s2597 = scalar_lea.sflag [#allocation4], %s2596
        %s2598 = sand.u32 %s445, 1
        %s2599 = smul.addr %s2598, 16
        %s2600 = scalar_lea.vmem [#allocation25], %s2599
        // Predicated region
        $region149: #{tpu_custom_call.1} parent=91 // pred_check
          %p2601 = pneg %p455
        $region150: #{tpu_custom_call.1} parent=91 // pred_check_branch
          %2603 = sbr.rel (%p2601) target = $region152
        $region151: #{tpu_custom_call.1} parent=91 // pred_region
          %s2605 = ssub.s32 256, 256
          %2606 = vsyncadd %s2597, %s2605
          %s2607 = smul.addr %s44, 2
          %s2608 = smul.addr %s2607, 128
          %s2609 = scalar_lea.hbm %s18, %s2608
          %s2611 = sshll.u32 %s2600, 4
          %s2612 = int_to_ptr.vmem [resolvable:$true] %s2611
          %2614 = dma.vmem_to_hbm [thread:$0]  %s2612, 256, %s2609, %s2597
        $region152: #{tpu_custom_call.1} parent=91 // pred_fallthru
          _
      $region92: #{tpu_custom_call.1} parent=5 // pred_fallthru
        _
      %p2615 = scmp.le.s32.totalorder 2, %s39
      // Predicated region
      $region153: #{tpu_custom_call.1} parent=5 // pred_check
        %p2616 = pneg %p2615
      $region154: #{tpu_custom_call.1} parent=5 // pred_check_branch
        %2618 = sbr.rel (%p2616) target = $region156
      $region155: #{tpu_custom_call.1} parent=5 // pred_region
        %s2619 = ssub.s32 %s39, 2
        // Predicated region
        $region157: #{tpu_custom_call.1} parent=155 // pred_check
          %p2620 = pneg %p461
        $region158: #{tpu_custom_call.1} parent=155 // pred_check_branch
          %2622 = sbr.rel (%p2620) target = $region160
        $region159: #{tpu_custom_call.1} parent=155 // pred_region
          %s2623 = sand.u32 %s446, 1
          %s2624 = scalar_lea.sflag [#allocation4], %s2623
          %s2625 = sand.u32 %s446, 1
          %s2626 = smul.addr %s2625, 16
          %s2627 = scalar_lea.vmem [#allocation25], %s2626
          %2628 = dma.done %s2624, 256
        $region160: #{tpu_custom_call.1} parent=155 // pred_fallthru
          _
      $region156: #{tpu_custom_call.1} parent=5 // pred_fallthru
        _
    $region6: #{tpu_custom_call.1} parent=1 // loop_footer
      %s43 = sadd.s32 1, %s39
    $region7: #{tpu_custom_call.1} parent=1 // loop_footer_branch
      %38 = sbr.rel target = $region3
    $region8: #{tpu_custom_call.1} parent=1 // loop_exit
      _
    %2629 = vsyncpa [#allocation3], 1
    %s2630 = scalar_lea.sflag [#allocation3], 1
    %2631 = vsyncpa %s2630, 1
    %2632 = vsyncpa [#allocation6], 1
    %s2633 = scalar_lea.sflag [#allocation6], 1
    %2634 = vsyncpa %s2633, 1
    %2635 = vsyncpa [#allocation9], 1
    %2636 = vsyncpa [#allocation12], 1
    %2637 = vsyncpa [#allocation15], 1
    %2638 = vsyncpa [#allocation18], 1
    %2639 = vsyncpa [#allocation21], 1
    %2640 = vsyncpa [#allocation24], 1
    %2641 = vsyncpa [#allocation4], 1
    %s2642 = scalar_lea.sflag [#allocation4], 1
    %2643 = vsyncpa %s2642, 1

</llo_original>
